<compile_context>
chip_gen: v7x
topology: tpu7x:2x2x1
jax: 0.10.0
libtpu: 0.0.40
codegen_flags: <defaults>
</compile_context>

<pallas_src>
import functools
import math

import jax
import jax.numpy as jnp
from jax.experimental import pallas as pl
from jax.experimental.pallas import tpu as pltpu

_LANE = 128
_MAX_GROUP_TILE = 8192  # keeps per-step intermediates and compile time bounded


# --------------------------------------------------------------------------- #
# Kernels
# --------------------------------------------------------------------------- #
def _sdpa_lane_groups_kernel(q_ref, k_ref, v_ref, o_ref, *, scale):
    """VPU path.  Blocks are (L2, Dk, Gt): the group axis G sits on lanes.

    scores[i, j, g] = sum_d q[i, d, g] * k[j, d, g]
    out[i, d, g]    = sum_j softmax_j(scores)[i, j, g] * v[j, d, g]

    Every contraction is over a sublane / leading axis, so each group (lane)
    is independent: pure VPU multiply-adds + cheap sublane reductions, with
    the EUP handling exp.  The MXU is never touched.
    """
    f32 = jnp.float32
    q = q_ref[...].astype(f32) * scale  # fold 1/sqrt(d_k) into the small Q tile (f32-exact)
    k = k_ref[...].astype(f32)
    v = v_ref[...].astype(f32)
    l2 = q.shape[0]

    for i in range(l2):  # static unroll over query positions
        # (1, Dk, Gt) * (L2, Dk, Gt) summed over d (the sublane axis) -> (L2, Gt)
        s_i = jnp.sum(q[i][None, :, :] * k, axis=1)
        m_i = jnp.max(s_i, axis=0, keepdims=True)          # (1, Gt)
        p_i = jnp.exp(s_i - m_i)                           # (L2, Gt)
        denom_i = jnp.sum(p_i, axis=0, keepdims=True)      # (1, Gt)
        # PV contraction over the key axis (leading axis) -> (Dk, Gt);
        # normalize after the contraction (denominator is tiny, exact divide).
        ctx_i = jnp.sum(p_i[:, None, :] * v, axis=0)
        o_ref[i, :, :] = (ctx_i * (1.0 / denom_i)).astype(o_ref.dtype)


def _sdpa_mxu_kernel(q_ref, k_ref, v_ref, o_ref, *, scale):
    """MXU path for large (L2, Dk).  Blocks are (Gt, L2, Dk): groups leading."""
    q = q_ref[...]
    k = k_ref[...]
    v = v_ref[...]
    # Batched contraction of the last dim (no explicit K^T relayout); operands
    # stay in their native dtype with f32 accumulation.
    s = jnp.einsum("gqd,gkd->gqk", q, k, preferred_element_type=jnp.float32)
    s = s * scale  # scale the f32 scores (exact regardless of input dtype)
    m = jnp.max(s, axis=-1, keepdims=True)
    p = jnp.exp(s - m)
    denom = jnp.sum(p, axis=-1, keepdims=True)
    ctx = jnp.einsum("gqk,gkd->gqd", p.astype(v.dtype), v,
                     preferred_element_type=jnp.float32)
    # Normalize after the PV contraction (cheaper than scaling the L2xL2 attn).
    o_ref[...] = (ctx * (1.0 / denom)).astype(o_ref.dtype)
    # TODO(synk): for very large len2 add a key-axis grid dim with an online
    # (flash-style) softmax so the (Gt, L2, L2) scores never materialize.


# --------------------------------------------------------------------------- #
# Sizing helpers
# --------------------------------------------------------------------------- #
def _round_up(x, m):
    return ((x + m - 1) // m) * m


def _vmem_limit_and_budget():
    """Generation-aware VMEM sizing: ~105 MiB of v5e/v6e's 128 MiB,
    ~52 MiB of v7x's 64 MiB per TensorCore."""
    try:
        cap = int(pltpu.get_tpu_info().vmem_capacity_bytes)
    except Exception:
        cap = 64 * 1024 * 1024  # conservative fallback (v7x per-core physical)
    limit = min(int(cap * 0.82), 112 * 1024 * 1024)  # headroom for compiler scratch
    limit = max(limit, 32 * 1024 * 1024)
    budget = int(limit * 0.85)  # what the tile chooser is allowed to spend
    return limit, budget


def _num_tensorcores():
    try:
        d = jax.devices()[0]
        return max(1, int(getattr(d, "num_cores", 1) or 1))
    except Exception:
        return 1


def _choose_lane_tile(G, per_group_bytes, budget, num_cores):
    """Group tile for the VPU path.  Returns Gt that is either a multiple of
    128 or the full G, so blocks stay lane-dense and layout-legal."""
    max_fit = max(1, min(budget // per_group_bytes, _MAX_GROUP_TILE))
    if max_fit >= G:
        # Whole problem fits in one step.  On multi-TensorCore parts, split into
        # an even number of lane-dense steps (>= 2 per core) so the 'parallel'
        # grid axis can be sharded and the pipeline has work to overlap — only
        # when that divides G exactly (no padding, no partial blocks).
        if num_cores > 1 and G % _LANE == 0:
            chunks = G // _LANE
            steps = 2 * num_cores
            while steps <= chunks:
                if chunks % steps == 0:
                    return (chunks // steps) * _LANE
                steps += num_cores
        return G
    # Tile the lane axis with the largest multiple-of-128 tile that fits; the
    # final step may be partial (masked store; padding lanes never mix).
    return max(_LANE, (max_fit // _LANE) * _LANE)


def _choose_batch_tile(G, per_group_bytes, budget):
    return max(1, min(G, budget // per_group_bytes, _MAX_GROUP_TILE))


# --------------------------------------------------------------------------- #
# Wrappers
# --------------------------------------------------------------------------- #
def _sdpa_lane_groups(Q, K, V, scale, vmem_limit, budget, num_cores):
    B, H, L1, L2, Dk = Q.shape
    G = B * H * L1
    itemsize = jnp.dtype(Q.dtype).itemsize

    # (B,H,L1,L2,Dk) -> (G,L2,Dk) is a free contiguous reshape; the transpose to
    # (L2,Dk,G) is one extra XLA pass over HBM, paid so the kernel itself is
    # lane-dense and pure-VPU (review: put G on the lane axis for tiny L2/Dk).
    q = jnp.transpose(Q.reshape(G, L2, Dk), (1, 2, 0))
    k = jnp.transpose(K.reshape(G, L2, Dk), (1, 2, 0))
    v = jnp.transpose(V.reshape(G, L2, Dk), (1, 2, 0))

    rdk = _round_up(Dk, 8)  # Dk sits on sublanes inside the block
    per_group = (
        2 * 4 * L2 * rdk * itemsize   # q/k/v/o blocks, double-buffered pipeline
        + 3 * L2 * rdk * 4            # f32 upcasts of q/k/v
        + 4 * L2 * rdk * 4            # per-step broadcast product / p / ctx intermediates
    )
    Gt = _choose_lane_tile(G, per_group, budget, num_cores)
    grid = (pl.cdiv(G, Gt),)

    spec = pl.BlockSpec((L2, Dk, Gt), lambda g: (0, 0, g))
    cost = pl.CostEstimate(
        flops=4 * G * L2 * L2 * Dk,
        transcendentals=G * L2 * L2,
        bytes_accessed=4 * G * L2 * Dk * itemsize,
    )

    out = pl.pallas_call(
        functools.partial(_sdpa_lane_groups_kernel, scale=scale),
        out_shape=jax.ShapeDtypeStruct((L2, Dk, G), Q.dtype),
        grid_spec=pltpu.PrefetchScalarGridSpec(
            num_scalar_prefetch=0,
            grid=grid,
            in_specs=[spec, spec, spec],
            out_specs=spec,
        ),
        compiler_params=pltpu.CompilerParams(
            dimension_semantics=("parallel",),
            vmem_limit_bytes=vmem_limit,
        ),
        cost_estimate=cost,
    )(q, k, v)

    return jnp.transpose(out, (2, 0, 1)).reshape(B, H, L1, L2, Dk)


def _sdpa_mxu(Q, K, V, scale, vmem_limit, budget, num_cores):
    del num_cores  # the 'parallel' grid axis is already shardable across cores
    B, H, L1, L2, Dk = Q.shape
    G = B * H * L1
    itemsize = jnp.dtype(Q.dtype).itemsize

    q = Q.reshape(G, L2, Dk)
    k = K.reshape(G, L2, Dk)
    v = V.reshape(G, L2, Dk)

    rsub = _round_up(L2, 8)
    rlane_d = _round_up(Dk, _LANE)
    rlane_k = _round_up(L2, _LANE)
    per_group = (
        2 * 4 * rsub * rlane_d * itemsize   # q/k/v/o blocks, double-buffered
        + 2 * rsub * rlane_k * 4            # f32 scores + exp(scores)
        + 2 * rsub * rlane_d * 4            # f32 context (+ cast copy)
    )
    Gt = _choose_batch_tile(G, per_group, budget)
    grid = (pl.cdiv(G, Gt),)

    spec = pl.BlockSpec((Gt, L2, Dk), lambda g: (g, 0, 0))
    cost = pl.CostEstimate(
        flops=4 * G * L2 * L2 * Dk,
        transcendentals=G * L2 * L2,
        bytes_accessed=4 * G * L2 * Dk * itemsize,
    )

    out = pl.pallas_call(
        functools.partial(_sdpa_mxu_kernel, scale=scale),
        out_shape=jax.ShapeDtypeStruct((G, L2, Dk), Q.dtype),
        grid_spec=pltpu.PrefetchScalarGridSpec(
            num_scalar_prefetch=0,
            grid=grid,
            in_specs=[spec, spec, spec],
            out_specs=spec,
        ),
        compiler_params=pltpu.CompilerParams(
            dimension_semantics=("parallel",),
            vmem_limit_bytes=vmem_limit,
        ),
        cost_estimate=cost,
    )(q, k, v)

    return out.reshape(B, H, L1, L2, Dk)


def scaled_dot_product_attention(Q, K, V, *, compute_dtype=None):
    """softmax(Q @ K^T / sqrt(d_k), axis=-1) @ V for (B, n_heads, len1, len2, d_k).

    compute_dtype may be set to jnp.bfloat16 to halve HBM traffic when that
    accuracy loss is acceptable; both kernels accumulate in f32 regardless.
    """
    assert Q.ndim == 5 and Q.shape == K.shape == V.shape
    B, H, L1, L2, Dk = Q.shape
    scale = 1.0 / math.sqrt(Dk)
    if compute_dtype is not None:
        Q, K, V = (x.astype(compute_dtype) for x in (Q, K, V))

    vmem_limit, budget = _vmem_limit_and_budget()
    num_cores = _num_tensorcores()

    # Tiny minor dims (the PIGAT case): pure-VPU kernel with groups on lanes.
    # Large minor dims: batched-MXU kernel with groups on the leading axis.
    if max(L2, Dk) <= 64:
        return _sdpa_lane_groups(Q, K, V, scale, vmem_limit, budget, num_cores)
    return _sdpa_mxu(Q, K, V, scale, vmem_limit, budget, num_cores)


# --------------------------------------------------------------------------- #
# Reference + test
# --------------------------------------------------------------------------- #
def _reference(Q, K, V):
    Dk = Q.shape[-1]
    scores = jnp.einsum(
        "bhlqd,bhlkd->bhlqk", Q, K, precision=jax.lax.Precision.HIGHEST
    ) / jnp.sqrt(jnp.float32(Dk))
    attn = jax.nn.softmax(scores, axis=-1)
    return jnp.einsum(
        "bhlqk,bhlkd->bhlqd", attn, V, precision=jax.lax.Precision.HIGHEST
    )


if __name__ == "__main__":
    key = jax.random.PRNGKey(0)
    kq, kk, kv = jax.random.split(key, 3)

    # Small shapes consistent with (B, n_heads, len1, len2, d_k).
    B, H, L1, L2, Dk = 2, 2, 4, 8, 16
    Q = jax.random.normal(kq, (B, H, L1, L2, Dk), dtype=jnp.float32)
    K = jax.random.normal(kk, (B, H, L1, L2, Dk), dtype=jnp.float32)
    V = jax.random.normal(kv, (B, H, L1, L2, Dk), dtype=jnp.float32)

    out = jax.block_until_ready(scaled_dot_product_attention(Q, K, V))

    ref = _reference(Q, K, V)
    assert out.shape == (B, H, L1, L2, Dk)
    assert jnp.allclose(out, ref, atol=1e-4, rtol=1e-4), "mismatch vs reference"

    print("KERNEL_OK")
</pallas_src>

<mosaic_0001>
module attributes {stable_mosaic.version = 11 : i64} {
  func.func @_sdpa_lane_groups_kernel(%arg0: i32, %arg1: memref<8x16x16xf32, #tpu.memory_space<vmem>>, %arg2: memref<8x16x16xf32, #tpu.memory_space<vmem>>, %arg3: memref<8x16x16xf32, #tpu.memory_space<vmem>>, %arg4: memref<8x16x16xf32, #tpu.memory_space<vmem>>) attributes {dimension_semantics = [#tpu.dimension_semantics<parallel>], iteration_bounds = array<i64: 1>, scalar_prefetch = 0 : i64, scratch_operands = 0 : i64, tpu.core_type = #tpu.core_type<tc>, window_params = [{transform_indices = @transform_0, window_bounds = array<i64: 8, 16, 16>}, {transform_indices = @transform_1, window_bounds = array<i64: 8, 16, 16>}, {transform_indices = @transform_2, window_bounds = array<i64: 8, 16, 16>}, {transform_indices = @transform_3, window_bounds = array<i64: 8, 16, 16>}]} {
    %c0 = arith.constant 0 : index
    %c0_0 = arith.constant 0 : index
    %c0_1 = arith.constant 0 : index
    %0 = vector.load %arg1[%c0, %c0_0, %c0_1] : memref<8x16x16xf32, #tpu.memory_space<vmem>>, vector<8x16x16xf32>
    %cst = arith.constant 2.500000e-01 : f32
    %1 = vector.broadcast %cst : f32 to vector<8x16x16xf32>
    %2 = arith.mulf %0, %1 : vector<8x16x16xf32>
    %c0_2 = arith.constant 0 : index
    %c0_3 = arith.constant 0 : index
    %c0_4 = arith.constant 0 : index
    %3 = vector.load %arg2[%c0_2, %c0_3, %c0_4] : memref<8x16x16xf32, #tpu.memory_space<vmem>>, vector<8x16x16xf32>
    %c0_5 = arith.constant 0 : index
    %c0_6 = arith.constant 0 : index
    %c0_7 = arith.constant 0 : index
    %4 = vector.load %arg3[%c0_5, %c0_6, %c0_7] : memref<8x16x16xf32, #tpu.memory_space<vmem>>, vector<8x16x16xf32>
    %5 = vector.extract_strided_slice %2 {offsets = [0, 0, 0], sizes = [1, 16, 16], strides = [1, 1, 1]} : vector<8x16x16xf32> to vector<1x16x16xf32>
    %6 = vector.shape_cast %5 : vector<1x16x16xf32> to vector<16x16xf32>
    %7 = vector.shape_cast %6 : vector<16x16xf32> to vector<1x16x16xf32>
    %8 = vector.broadcast %7 : vector<1x16x16xf32> to vector<8x16x16xf32>
    %9 = arith.mulf %8, %3 : vector<8x16x16xf32>
    %cst_8 = arith.constant dense<0.000000e+00> : vector<8x16xf32>
    %10 = vector.multi_reduction <add>, %9, %cst_8 [1] : vector<8x16x16xf32> to vector<8x16xf32>
    %cst_9 = arith.constant dense<0xFF800000> : vector<16xf32>
    %11 = vector.multi_reduction <maximumf>, %10, %cst_9 [0] : vector<8x16xf32> to vector<16xf32>
    %12 = vector.shape_cast %11 : vector<16xf32> to vector<1x16xf32>
    %13 = vector.broadcast %12 : vector<1x16xf32> to vector<8x16xf32>
    %14 = arith.subf %10, %13 : vector<8x16xf32>
    %15 = math.exp %14 : vector<8x16xf32>
    %cst_10 = arith.constant dense<0.000000e+00> : vector<16xf32>
    %16 = vector.multi_reduction <add>, %15, %cst_10 [0] : vector<8x16xf32> to vector<16xf32>
    %17 = vector.shape_cast %16 : vector<16xf32> to vector<1x16xf32>
    %18 = vector.shape_cast %15 : vector<8x16xf32> to vector<8x1x16xf32>
    %19 = vector.broadcast %18 : vector<8x1x16xf32> to vector<8x16x16xf32>
    %20 = arith.mulf %19, %4 : vector<8x16x16xf32>
    %cst_11 = arith.constant dense<0.000000e+00> : vector<16x16xf32>
    %21 = vector.multi_reduction <add>, %20, %cst_11 [0] : vector<8x16x16xf32> to vector<16x16xf32>
    %cst_12 = arith.constant 1.000000e+00 : f32
    %22 = vector.broadcast %cst_12 : f32 to vector<1x16xf32>
    %23 = arith.divf %22, %17 : vector<1x16xf32>
    %24 = vector.broadcast %23 : vector<1x16xf32> to vector<16x16xf32>
    %25 = arith.mulf %21, %24 : vector<16x16xf32>
    %c0_13 = arith.constant 0 : index
    %c0_14 = arith.constant 0 : index
    %c0_15 = arith.constant 0 : index
    %26 = vector.load %arg4[%c0_13, %c0_14, %c0_15] : memref<8x16x16xf32, #tpu.memory_space<vmem>>, vector<1x16x16xf32>
    %27 = vector.shape_cast %26 : vector<1x16x16xf32> to vector<16x16xf32>
    %28 = vector.shape_cast %25 : vector<16x16xf32> to vector<1x16x16xf32>
    tpu.vector_store %arg4[%c0_13, %c0_14, %c0_15], %28 {strides = array<i32>} : memref<8x16x16xf32, #tpu.memory_space<vmem>>, vector<1x16x16xf32>,
    %29 = vector.extract_strided_slice %2 {offsets = [1, 0, 0], sizes = [1, 16, 16], strides = [1, 1, 1]} : vector<8x16x16xf32> to vector<1x16x16xf32>
    %30 = vector.shape_cast %29 : vector<1x16x16xf32> to vector<16x16xf32>
    %31 = vector.shape_cast %30 : vector<16x16xf32> to vector<1x16x16xf32>
    %32 = vector.broadcast %31 : vector<1x16x16xf32> to vector<8x16x16xf32>
    %33 = arith.mulf %32, %3 : vector<8x16x16xf32>
    %cst_16 = arith.constant dense<0.000000e+00> : vector<8x16xf32>
    %34 = vector.multi_reduction <add>, %33, %cst_16 [1] : vector<8x16x16xf32> to vector<8x16xf32>
    %cst_17 = arith.constant dense<0xFF800000> : vector<16xf32>
    %35 = vector.multi_reduction <maximumf>, %34, %cst_17 [0] : vector<8x16xf32> to vector<16xf32>
    %36 = vector.shape_cast %35 : vector<16xf32> to vector<1x16xf32>
    %37 = vector.broadcast %36 : vector<1x16xf32> to vector<8x16xf32>
    %38 = arith.subf %34, %37 : vector<8x16xf32>
    %39 = math.exp %38 : vector<8x16xf32>
    %cst_18 = arith.constant dense<0.000000e+00> : vector<16xf32>
    %40 = vector.multi_reduction <add>, %39, %cst_18 [0] : vector<8x16xf32> to vector<16xf32>
    %41 = vector.shape_cast %40 : vector<16xf32> to vector<1x16xf32>
    %42 = vector.shape_cast %39 : vector<8x16xf32> to vector<8x1x16xf32>
    %43 = vector.broadcast %42 : vector<8x1x16xf32> to vector<8x16x16xf32>
    %44 = arith.mulf %43, %4 : vector<8x16x16xf32>
    %cst_19 = arith.constant dense<0.000000e+00> : vector<16x16xf32>
    %45 = vector.multi_reduction <add>, %44, %cst_19 [0] : vector<8x16x16xf32> to vector<16x16xf32>
    %cst_20 = arith.constant 1.000000e+00 : f32
    %46 = vector.broadcast %cst_20 : f32 to vector<1x16xf32>
    %47 = arith.divf %46, %41 : vector<1x16xf32>
    %48 = vector.broadcast %47 : vector<1x16xf32> to vector<16x16xf32>
    %49 = arith.mulf %45, %48 : vector<16x16xf32>
    %c1 = arith.constant 1 : index
    %c0_21 = arith.constant 0 : index
    %c0_22 = arith.constant 0 : index
    %50 = vector.load %arg4[%c1, %c0_21, %c0_22] : memref<8x16x16xf32, #tpu.memory_space<vmem>>, vector<1x16x16xf32>
    %51 = vector.shape_cast %50 : vector<1x16x16xf32> to vector<16x16xf32>
    %52 = vector.shape_cast %49 : vector<16x16xf32> to vector<1x16x16xf32>
    tpu.vector_store %arg4[%c1, %c0_21, %c0_22], %52 {strides = array<i32>} : memref<8x16x16xf32, #tpu.memory_space<vmem>>, vector<1x16x16xf32>,
    %53 = vector.extract_strided_slice %2 {offsets = [2, 0, 0], sizes = [1, 16, 16], strides = [1, 1, 1]} : vector<8x16x16xf32> to vector<1x16x16xf32>
    %54 = vector.shape_cast %53 : vector<1x16x16xf32> to vector<16x16xf32>
    %55 = vector.shape_cast %54 : vector<16x16xf32> to vector<1x16x16xf32>
    %56 = vector.broadcast %55 : vector<1x16x16xf32> to vector<8x16x16xf32>
    %57 = arith.mulf %56, %3 : vector<8x16x16xf32>
    %cst_23 = arith.constant dense<0.000000e+00> : vector<8x16xf32>
    %58 = vector.multi_reduction <add>, %57, %cst_23 [1] : vector<8x16x16xf32> to vector<8x16xf32>
    %cst_24 = arith.constant dense<0xFF800000> : vector<16xf32>
    %59 = vector.multi_reduction <maximumf>, %58, %cst_24 [0] : vector<8x16xf32> to vector<16xf32>
    %60 = vector.shape_cast %59 : vector<16xf32> to vector<1x16xf32>
    %61 = vector.broadcast %60 : vector<1x16xf32> to vector<8x16xf32>
    %62 = arith.subf %58, %61 : vector<8x16xf32>
    %63 = math.exp %62 : vector<8x16xf32>
    %cst_25 = arith.constant dense<0.000000e+00> : vector<16xf32>
    %64 = vector.multi_reduction <add>, %63, %cst_25 [0] : vector<8x16xf32> to vector<16xf32>
    %65 = vector.shape_cast %64 : vector<16xf32> to vector<1x16xf32>
    %66 = vector.shape_cast %63 : vector<8x16xf32> to vector<8x1x16xf32>
    %67 = vector.broadcast %66 : vector<8x1x16xf32> to vector<8x16x16xf32>
    %68 = arith.mulf %67, %4 : vector<8x16x16xf32>
    %cst_26 = arith.constant dense<0.000000e+00> : vector<16x16xf32>
    %69 = vector.multi_reduction <add>, %68, %cst_26 [0] : vector<8x16x16xf32> to vector<16x16xf32>
    %cst_27 = arith.constant 1.000000e+00 : f32
    %70 = vector.broadcast %cst_27 : f32 to vector<1x16xf32>
    %71 = arith.divf %70, %65 : vector<1x16xf32>
    %72 = vector.broadcast %71 : vector<1x16xf32> to vector<16x16xf32>
    %73 = arith.mulf %69, %72 : vector<16x16xf32>
    %c2 = arith.constant 2 : index
    %c0_28 = arith.constant 0 : index
    %c0_29 = arith.constant 0 : index
    %74 = vector.load %arg4[%c2, %c0_28, %c0_29] : memref<8x16x16xf32, #tpu.memory_space<vmem>>, vector<1x16x16xf32>
    %75 = vector.shape_cast %74 : vector<1x16x16xf32> to vector<16x16xf32>
    %76 = vector.shape_cast %73 : vector<16x16xf32> to vector<1x16x16xf32>
    tpu.vector_store %arg4[%c2, %c0_28, %c0_29], %76 {strides = array<i32>} : memref<8x16x16xf32, #tpu.memory_space<vmem>>, vector<1x16x16xf32>,
    %77 = vector.extract_strided_slice %2 {offsets = [3, 0, 0], sizes = [1, 16, 16], strides = [1, 1, 1]} : vector<8x16x16xf32> to vector<1x16x16xf32>
    %78 = vector.shape_cast %77 : vector<1x16x16xf32> to vector<16x16xf32>
    %79 = vector.shape_cast %78 : vector<16x16xf32> to vector<1x16x16xf32>
    %80 = vector.broadcast %79 : vector<1x16x16xf32> to vector<8x16x16xf32>
    %81 = arith.mulf %80, %3 : vector<8x16x16xf32>
    %cst_30 = arith.constant dense<0.000000e+00> : vector<8x16xf32>
    %82 = vector.multi_reduction <add>, %81, %cst_30 [1] : vector<8x16x16xf32> to vector<8x16xf32>
    %cst_31 = arith.constant dense<0xFF800000> : vector<16xf32>
    %83 = vector.multi_reduction <maximumf>, %82, %cst_31 [0] : vector<8x16xf32> to vector<16xf32>
    %84 = vector.shape_cast %83 : vector<16xf32> to vector<1x16xf32>
    %85 = vector.broadcast %84 : vector<1x16xf32> to vector<8x16xf32>
    %86 = arith.subf %82, %85 : vector<8x16xf32>
    %87 = math.exp %86 : vector<8x16xf32>
    %cst_32 = arith.constant dense<0.000000e+00> : vector<16xf32>
    %88 = vector.multi_reduction <add>, %87, %cst_32 [0] : vector<8x16xf32> to vector<16xf32>
    %89 = vector.shape_cast %88 : vector<16xf32> to vector<1x16xf32>
    %90 = vector.shape_cast %87 : vector<8x16xf32> to vector<8x1x16xf32>
    %91 = vector.broadcast %90 : vector<8x1x16xf32> to vector<8x16x16xf32>
    %92 = arith.mulf %91, %4 : vector<8x16x16xf32>
    %cst_33 = arith.constant dense<0.000000e+00> : vector<16x16xf32>
    %93 = vector.multi_reduction <add>, %92, %cst_33 [0] : vector<8x16x16xf32> to vector<16x16xf32>
    %cst_34 = arith.constant 1.000000e+00 : f32
    %94 = vector.broadcast %cst_34 : f32 to vector<1x16xf32>
    %95 = arith.divf %94, %89 : vector<1x16xf32>
    %96 = vector.broadcast %95 : vector<1x16xf32> to vector<16x16xf32>
    %97 = arith.mulf %93, %96 : vector<16x16xf32>
    %c3 = arith.constant 3 : index
    %c0_35 = arith.constant 0 : index
    %c0_36 = arith.constant 0 : index
    %98 = vector.load %arg4[%c3, %c0_35, %c0_36] : memref<8x16x16xf32, #tpu.memory_space<vmem>>, vector<1x16x16xf32>
    %99 = vector.shape_cast %98 : vector<1x16x16xf32> to vector<16x16xf32>
    %100 = vector.shape_cast %97 : vector<16x16xf32> to vector<1x16x16xf32>
    tpu.vector_store %arg4[%c3, %c0_35, %c0_36], %100 {strides = array<i32>} : memref<8x16x16xf32, #tpu.memory_space<vmem>>, vector<1x16x16xf32>,
    %101 = vector.extract_strided_slice %2 {offsets = [4, 0, 0], sizes = [1, 16, 16], strides = [1, 1, 1]} : vector<8x16x16xf32> to vector<1x16x16xf32>
    %102 = vector.shape_cast %101 : vector<1x16x16xf32> to vector<16x16xf32>
    %103 = vector.shape_cast %102 : vector<16x16xf32> to vector<1x16x16xf32>
    %104 = vector.broadcast %103 : vector<1x16x16xf32> to vector<8x16x16xf32>
    %105 = arith.mulf %104, %3 : vector<8x16x16xf32>
    %cst_37 = arith.constant dense<0.000000e+00> : vector<8x16xf32>
    %106 = vector.multi_reduction <add>, %105, %cst_37 [1] : vector<8x16x16xf32> to vector<8x16xf32>
    %cst_38 = arith.constant dense<0xFF800000> : vector<16xf32>
    %107 = vector.multi_reduction <maximumf>, %106, %cst_38 [0] : vector<8x16xf32> to vector<16xf32>
    %108 = vector.shape_cast %107 : vector<16xf32> to vector<1x16xf32>
    %109 = vector.broadcast %108 : vector<1x16xf32> to vector<8x16xf32>
    %110 = arith.subf %106, %109 : vector<8x16xf32>
    %111 = math.exp %110 : vector<8x16xf32>
    %cst_39 = arith.constant dense<0.000000e+00> : vector<16xf32>
    %112 = vector.multi_reduction <add>, %111, %cst_39 [0] : vector<8x16xf32> to vector<16xf32>
    %113 = vector.shape_cast %112 : vector<16xf32> to vector<1x16xf32>
    %114 = vector.shape_cast %111 : vector<8x16xf32> to vector<8x1x16xf32>
    %115 = vector.broadcast %114 : vector<8x1x16xf32> to vector<8x16x16xf32>
    %116 = arith.mulf %115, %4 : vector<8x16x16xf32>
    %cst_40 = arith.constant dense<0.000000e+00> : vector<16x16xf32>
    %117 = vector.multi_reduction <add>, %116, %cst_40 [0] : vector<8x16x16xf32> to vector<16x16xf32>
    %cst_41 = arith.constant 1.000000e+00 : f32
    %118 = vector.broadcast %cst_41 : f32 to vector<1x16xf32>
    %119 = arith.divf %118, %113 : vector<1x16xf32>
    %120 = vector.broadcast %119 : vector<1x16xf32> to vector<16x16xf32>
    %121 = arith.mulf %117, %120 : vector<16x16xf32>
    %c4 = arith.constant 4 : index
    %c0_42 = arith.constant 0 : index
    %c0_43 = arith.constant 0 : index
    %122 = vector.load %arg4[%c4, %c0_42, %c0_43] : memref<8x16x16xf32, #tpu.memory_space<vmem>>, vector<1x16x16xf32>
    %123 = vector.shape_cast %122 : vector<1x16x16xf32> to vector<16x16xf32>
    %124 = vector.shape_cast %121 : vector<16x16xf32> to vector<1x16x16xf32>
    tpu.vector_store %arg4[%c4, %c0_42, %c0_43], %124 {strides = array<i32>} : memref<8x16x16xf32, #tpu.memory_space<vmem>>, vector<1x16x16xf32>,
    %125 = vector.extract_strided_slice %2 {offsets = [5, 0, 0], sizes = [1, 16, 16], strides = [1, 1, 1]} : vector<8x16x16xf32> to vector<1x16x16xf32>
    %126 = vector.shape_cast %125 : vector<1x16x16xf32> to vector<16x16xf32>
    %127 = vector.shape_cast %126 : vector<16x16xf32> to vector<1x16x16xf32>
    %128 = vector.broadcast %127 : vector<1x16x16xf32> to vector<8x16x16xf32>
    %129 = arith.mulf %128, %3 : vector<8x16x16xf32>
    %cst_44 = arith.constant dense<0.000000e+00> : vector<8x16xf32>
    %130 = vector.multi_reduction <add>, %129, %cst_44 [1] : vector<8x16x16xf32> to vector<8x16xf32>
    %cst_45 = arith.constant dense<0xFF800000> : vector<16xf32>
    %131 = vector.multi_reduction <maximumf>, %130, %cst_45 [0] : vector<8x16xf32> to vector<16xf32>
    %132 = vector.shape_cast %131 : vector<16xf32> to vector<1x16xf32>
    %133 = vector.broadcast %132 : vector<1x16xf32> to vector<8x16xf32>
    %134 = arith.subf %130, %133 : vector<8x16xf32>
    %135 = math.exp %134 : vector<8x16xf32>
    %cst_46 = arith.constant dense<0.000000e+00> : vector<16xf32>
    %136 = vector.multi_reduction <add>, %135, %cst_46 [0] : vector<8x16xf32> to vector<16xf32>
    %137 = vector.shape_cast %136 : vector<16xf32> to vector<1x16xf32>
    %138 = vector.shape_cast %135 : vector<8x16xf32> to vector<8x1x16xf32>
    %139 = vector.broadcast %138 : vector<8x1x16xf32> to vector<8x16x16xf32>
    %140 = arith.mulf %139, %4 : vector<8x16x16xf32>
    %cst_47 = arith.constant dense<0.000000e+00> : vector<16x16xf32>
    %141 = vector.multi_reduction <add>, %140, %cst_47 [0] : vector<8x16x16xf32> to vector<16x16xf32>
    %cst_48 = arith.constant 1.000000e+00 : f32
    %142 = vector.broadcast %cst_48 : f32 to vector<1x16xf32>
    %143 = arith.divf %142, %137 : vector<1x16xf32>
    %144 = vector.broadcast %143 : vector<1x16xf32> to vector<16x16xf32>
    %145 = arith.mulf %141, %144 : vector<16x16xf32>
    %c5 = arith.constant 5 : index
    %c0_49 = arith.constant 0 : index
    %c0_50 = arith.constant 0 : index
    %146 = vector.load %arg4[%c5, %c0_49, %c0_50] : memref<8x16x16xf32, #tpu.memory_space<vmem>>, vector<1x16x16xf32>
    %147 = vector.shape_cast %146 : vector<1x16x16xf32> to vector<16x16xf32>
    %148 = vector.shape_cast %145 : vector<16x16xf32> to vector<1x16x16xf32>
    tpu.vector_store %arg4[%c5, %c0_49, %c0_50], %148 {strides = array<i32>} : memref<8x16x16xf32, #tpu.memory_space<vmem>>, vector<1x16x16xf32>,
    %149 = vector.extract_strided_slice %2 {offsets = [6, 0, 0], sizes = [1, 16, 16], strides = [1, 1, 1]} : vector<8x16x16xf32> to vector<1x16x16xf32>
    %150 = vector.shape_cast %149 : vector<1x16x16xf32> to vector<16x16xf32>
    %151 = vector.shape_cast %150 : vector<16x16xf32> to vector<1x16x16xf32>
    %152 = vector.broadcast %151 : vector<1x16x16xf32> to vector<8x16x16xf32>
    %153 = arith.mulf %152, %3 : vector<8x16x16xf32>
    %cst_51 = arith.constant dense<0.000000e+00> : vector<8x16xf32>
    %154 = vector.multi_reduction <add>, %153, %cst_51 [1] : vector<8x16x16xf32> to vector<8x16xf32>
    %cst_52 = arith.constant dense<0xFF800000> : vector<16xf32>
    %155 = vector.multi_reduction <maximumf>, %154, %cst_52 [0] : vector<8x16xf32> to vector<16xf32>
    %156 = vector.shape_cast %155 : vector<16xf32> to vector<1x16xf32>
    %157 = vector.broadcast %156 : vector<1x16xf32> to vector<8x16xf32>
    %158 = arith.subf %154, %157 : vector<8x16xf32>
    %159 = math.exp %158 : vector<8x16xf32>
    %cst_53 = arith.constant dense<0.000000e+00> : vector<16xf32>
    %160 = vector.multi_reduction <add>, %159, %cst_53 [0] : vector<8x16xf32> to vector<16xf32>
    %161 = vector.shape_cast %160 : vector<16xf32> to vector<1x16xf32>
    %162 = vector.shape_cast %159 : vector<8x16xf32> to vector<8x1x16xf32>
    %163 = vector.broadcast %162 : vector<8x1x16xf32> to vector<8x16x16xf32>
    %164 = arith.mulf %163, %4 : vector<8x16x16xf32>
    %cst_54 = arith.constant dense<0.000000e+00> : vector<16x16xf32>
    %165 = vector.multi_reduction <add>, %164, %cst_54 [0] : vector<8x16x16xf32> to vector<16x16xf32>
    %cst_55 = arith.constant 1.000000e+00 : f32
    %166 = vector.broadcast %cst_55 : f32 to vector<1x16xf32>
    %167 = arith.divf %166, %161 : vector<1x16xf32>
    %168 = vector.broadcast %167 : vector<1x16xf32> to vector<16x16xf32>
    %169 = arith.mulf %165, %168 : vector<16x16xf32>
    %c6 = arith.constant 6 : index
    %c0_56 = arith.constant 0 : index
    %c0_57 = arith.constant 0 : index
    %170 = vector.load %arg4[%c6, %c0_56, %c0_57] : memref<8x16x16xf32, #tpu.memory_space<vmem>>, vector<1x16x16xf32>
    %171 = vector.shape_cast %170 : vector<1x16x16xf32> to vector<16x16xf32>
    %172 = vector.shape_cast %169 : vector<16x16xf32> to vector<1x16x16xf32>
    tpu.vector_store %arg4[%c6, %c0_56, %c0_57], %172 {strides = array<i32>} : memref<8x16x16xf32, #tpu.memory_space<vmem>>, vector<1x16x16xf32>,
    %173 = vector.extract_strided_slice %2 {offsets = [7, 0, 0], sizes = [1, 16, 16], strides = [1, 1, 1]} : vector<8x16x16xf32> to vector<1x16x16xf32>
    %174 = vector.shape_cast %173 : vector<1x16x16xf32> to vector<16x16xf32>
    %175 = vector.shape_cast %174 : vector<16x16xf32> to vector<1x16x16xf32>
    %176 = vector.broadcast %175 : vector<1x16x16xf32> to vector<8x16x16xf32>
    %177 = arith.mulf %176, %3 : vector<8x16x16xf32>
    %cst_58 = arith.constant dense<0.000000e+00> : vector<8x16xf32>
    %178 = vector.multi_reduction <add>, %177, %cst_58 [1] : vector<8x16x16xf32> to vector<8x16xf32>
    %cst_59 = arith.constant dense<0xFF800000> : vector<16xf32>
    %179 = vector.multi_reduction <maximumf>, %178, %cst_59 [0] : vector<8x16xf32> to vector<16xf32>
    %180 = vector.shape_cast %179 : vector<16xf32> to vector<1x16xf32>
    %181 = vector.broadcast %180 : vector<1x16xf32> to vector<8x16xf32>
    %182 = arith.subf %178, %181 : vector<8x16xf32>
    %183 = math.exp %182 : vector<8x16xf32>
    %cst_60 = arith.constant dense<0.000000e+00> : vector<16xf32>
    %184 = vector.multi_reduction <add>, %183, %cst_60 [0] : vector<8x16xf32> to vector<16xf32>
    %185 = vector.shape_cast %184 : vector<16xf32> to vector<1x16xf32>
    %186 = vector.shape_cast %183 : vector<8x16xf32> to vector<8x1x16xf32>
    %187 = vector.broadcast %186 : vector<8x1x16xf32> to vector<8x16x16xf32>
    %188 = arith.mulf %187, %4 : vector<8x16x16xf32>
    %cst_61 = arith.constant dense<0.000000e+00> : vector<16x16xf32>
    %189 = vector.multi_reduction <add>, %188, %cst_61 [0] : vector<8x16x16xf32> to vector<16x16xf32>
    %cst_62 = arith.constant 1.000000e+00 : f32
    %190 = vector.broadcast %cst_62 : f32 to vector<1x16xf32>
    %191 = arith.divf %190, %185 : vector<1x16xf32>
    %192 = vector.broadcast %191 : vector<1x16xf32> to vector<16x16xf32>
    %193 = arith.mulf %189, %192 : vector<16x16xf32>
    %c7 = arith.constant 7 : index
    %c0_63 = arith.constant 0 : index
    %c0_64 = arith.constant 0 : index
    %194 = vector.load %arg4[%c7, %c0_63, %c0_64] : memref<8x16x16xf32, #tpu.memory_space<vmem>>, vector<1x16x16xf32>
    %195 = vector.shape_cast %194 : vector<1x16x16xf32> to vector<16x16xf32>
    %196 = vector.shape_cast %193 : vector<16x16xf32> to vector<1x16x16xf32>
    tpu.vector_store %arg4[%c7, %c0_63, %c0_64], %196 {strides = array<i32>} : memref<8x16x16xf32, #tpu.memory_space<vmem>>, vector<1x16x16xf32>,
    return
  }
  func.func @transform_0(%arg0: i32) -> (i32, i32, i32) {
    %c0_i32 = arith.constant 0 : i32
    %c0_i32_0 = arith.constant 0 : i32
    %c0_i32_1 = arith.constant 0 : i32
    return %c0_i32, %c0_i32_0, %arg0 : i32, i32, i32
  }
  func.func @transform_1(%arg0: i32) -> (i32, i32, i32) {
    %c0_i32 = arith.constant 0 : i32
    %c0_i32_0 = arith.constant 0 : i32
    %c0_i32_1 = arith.constant 0 : i32
    return %c0_i32, %c0_i32_0, %arg0 : i32, i32, i32
  }
  func.func @transform_2(%arg0: i32) -> (i32, i32, i32) {
    %c0_i32 = arith.constant 0 : i32
    %c0_i32_0 = arith.constant 0 : i32
    %c0_i32_1 = arith.constant 0 : i32
    return %c0_i32, %c0_i32_0, %arg0 : i32, i32, i32
  }
  func.func @transform_3(%arg0: i32) -> (i32, i32, i32) {
    %c0_i32 = arith.constant 0 : i32
    %c0_i32_0 = arith.constant 0 : i32
    %c0_i32_1 = arith.constant 0 : i32
    return %c0_i32, %c0_i32_0, %arg0 : i32, i32, i32
  }
}

</mosaic_0001>

<llo_original>
// kernel: tpu_custom_call.1
$region0: #{tpu_custom_call.1}
  #allocation0 [shape = 'u32[]', space=smem, size = 0x4, offset = 0x4, fixed_abs, tag = 'smem constant byte address 0x4 - core index']
  #allocation1 [shape = 'u32[144,128]{1,0:T(1,128)}', space=vmem, size = 0x12000, scoped, tag = 'internal scratch']
  %s0 = inlined_call_operand.hbm [shape: f32[8,16,16], index: 0, kind: input, shape index: {}]
  %s1 = inlined_call_operand.hbm [shape: f32[8,16,16], index: 1, kind: input, shape index: {}]
  %s2 = inlined_call_operand.hbm [shape: f32[8,16,16], index: 2, kind: input, shape index: {}]
  %s3 = inlined_call_operand.hbm [shape: f32[8,16,16], index: 3, kind: output, shape index: {}]
  %s4 = sld [smem:[#allocation0]]
  $region34: #{tpu_custom_call.1} parent=0
    _
  %s6 = ssub.s32 1, %s4
  %s7 = scalar_select 0, %s6, %s4
  $region1: #{tpu_custom_call.1} parent=0
    #allocation2 [shape = 'u8[65536]{0}', space=vmem, size = 0x10000, scoped, tag = 'input window, operand 0, single buffered']
    #allocation3 [shape = 's32[1]{0}', space=sflag, size = 0x4, scoped, tag = 'scoped memory for tpu_custom_call.1']
    #allocation4 [shape = 's32[1]{0}', space=sflag, size = 0x4, scoped, tag = 'scoped memory for tpu_custom_call.1']
    #allocation5 [shape = 'u8[65536]{0}', space=vmem, size = 0x10000, scoped, tag = 'input window, operand 1, single buffered']
    #allocation6 [shape = 's32[1]{0}', space=sflag, size = 0x4, scoped, tag = 'scoped memory for tpu_custom_call.1']
    #allocation7 [shape = 'u8[65536]{0}', space=vmem, size = 0x10000, scoped, tag = 'input window, operand 2, single buffered']
    #allocation8 [shape = 'u8[65536]{0}', space=vmem, size = 0x10000, scoped, tag = 'output window, operand 0, single buffered']
    %8 = vsyncpa [#allocation3], 0
    %9 = vsyncpa [#allocation6], 0
    %10 = vsyncpa [#allocation4], 0
    // Predicated region
    $region2: #{tpu_custom_call.1} parent=1 // pred_check
      _
    $region3: #{tpu_custom_call.1} parent=1 // pred_check_branch
      %12 = sbr.rel (0) target = $region5
    $region4: #{tpu_custom_call.1} parent=1 // pred_region
      %s14 = ssub.s32 2048, 2048
      %15 = vsyncadd [#allocation3], %s14
      %s16 = sshll.u32 [#allocation2], 4
      %s17 = int_to_ptr.vmem [resolvable:$true] %s16
      %22 = dma.hbm_to_vmem [thread:$0]  %s0, 2048, %s17, [#allocation3], 128, 128, 8
    $region5: #{tpu_custom_call.1} parent=1 // pred_fallthru
      _
    // Predicated region
    $region6: #{tpu_custom_call.1} parent=1 // pred_check
      _
    $region7: #{tpu_custom_call.1} parent=1 // pred_check_branch
      %24 = sbr.rel (0) target = $region9
    $region8: #{tpu_custom_call.1} parent=1 // pred_region
      %s26 = ssub.s32 2048, 2048
      %27 = vsyncadd [#allocation6], %s26
      %s28 = sshll.u32 [#allocation5], 4
      %s29 = int_to_ptr.vmem [resolvable:$true] %s28
      %34 = dma.hbm_to_vmem [thread:$0]  %s1, 2048, %s29, [#allocation6], 128, 128, 8
    $region9: #{tpu_custom_call.1} parent=1 // pred_fallthru
      _
    // Predicated region
    $region10: #{tpu_custom_call.1} parent=1 // pred_check
      _
    $region11: #{tpu_custom_call.1} parent=1 // pred_check_branch
      %36 = sbr.rel (0) target = $region13
    $region12: #{tpu_custom_call.1} parent=1 // pred_region
      %s38 = ssub.s32 2048, 2048
      %39 = vsyncadd [#allocation6], %s38
      %s40 = sshll.u32 [#allocation7], 4
      %s41 = int_to_ptr.vmem [resolvable:$true] %s40
      %46 = dma.hbm_to_vmem [thread:$0]  %s2, 2048, %s41, [#allocation6], 128, 128, 8
    $region13: #{tpu_custom_call.1} parent=1 // pred_fallthru
      _
    // Predicated region
    $region14: #{tpu_custom_call.1} parent=1 // pred_check
      _
    $region15: #{tpu_custom_call.1} parent=1 // pred_check_branch
      %48 = sbr.rel (0) target = $region17
    $region16: #{tpu_custom_call.1} parent=1 // pred_region
      %49 = dma.done [#allocation3], 2048
    $region17: #{tpu_custom_call.1} parent=1 // pred_fallthru
      _
    // Predicated region
    $region18: #{tpu_custom_call.1} parent=1 // pred_check
      _
    $region19: #{tpu_custom_call.1} parent=1 // pred_check_branch
      %51 = sbr.rel (0) target = $region21
    $region20: #{tpu_custom_call.1} parent=1 // pred_region
      %52 = dma.done [#allocation6], 2048
    $region21: #{tpu_custom_call.1} parent=1 // pred_fallthru
      _
    // Predicated region
    $region22: #{tpu_custom_call.1} parent=1 // pred_check
      _
    $region23: #{tpu_custom_call.1} parent=1 // pred_check_branch
      %54 = sbr.rel (0) target = $region25
    $region24: #{tpu_custom_call.1} parent=1 // pred_region
      %55 = dma.done [#allocation6], 2048
    $region25: #{tpu_custom_call.1} parent=1 // pred_fallthru
      _
    %v56 = vld [vmem:[#allocation2] sm:$0xff]
    %v57 = vld [vmem:[#allocation2 + $0x8] sm:$0xff]
    %v58 = vld [vmem:[#allocation2 + $0x10] sm:$0xff]
    %v59 = vld [vmem:[#allocation2 + $0x18] sm:$0xff]
    %v60 = vld [vmem:[#allocation2 + $0x20] sm:$0xff]
    %v61 = vld [vmem:[#allocation2 + $0x28] sm:$0xff]
    %v62 = vld [vmem:[#allocation2 + $0x30] sm:$0xff]
    %v63 = vld [vmem:[#allocation2 + $0x38] sm:$0xff]
    %v64 = vld [vmem:[#allocation2 + $0x40] sm:$0xff]
    %v65 = vld [vmem:[#allocation2 + $0x48] sm:$0xff]
    %v66 = vld [vmem:[#allocation2 + $0x50] sm:$0xff]
    %v67 = vld [vmem:[#allocation2 + $0x58] sm:$0xff]
    %v68 = vld [vmem:[#allocation2 + $0x60] sm:$0xff]
    %v69 = vld [vmem:[#allocation2 + $0x68] sm:$0xff]
    %v70 = vld [vmem:[#allocation2 + $0x70] sm:$0xff]
    %v71 = vld [vmem:[#allocation2 + $0x78] sm:$0xff]
    %v72 = vmul.f32 %v56, 0.25
    %v73 = vmul.f32 %v57, 0.25
    %v74 = vmul.f32 %v58, 0.25
    %v75 = vmul.f32 %v59, 0.25
    %v76 = vmul.f32 %v60, 0.25
    %v77 = vmul.f32 %v61, 0.25
    %v78 = vmul.f32 %v62, 0.25
    %v79 = vmul.f32 %v63, 0.25
    %v80 = vmul.f32 %v64, 0.25
    %v81 = vmul.f32 %v65, 0.25
    %v82 = vmul.f32 %v66, 0.25
    %v83 = vmul.f32 %v67, 0.25
    %v84 = vmul.f32 %v68, 0.25
    %v85 = vmul.f32 %v69, 0.25
    %v86 = vmul.f32 %v70, 0.25
    %v87 = vmul.f32 %v71, 0.25
    %v88 = vld [vmem:[#allocation5] sm:$0xff]
    %v89 = vld [vmem:[#allocation5 + $0x8] sm:$0xff]
    %v90 = vld [vmem:[#allocation5 + $0x10] sm:$0xff]
    %v91 = vld [vmem:[#allocation5 + $0x18] sm:$0xff]
    %v92 = vld [vmem:[#allocation5 + $0x20] sm:$0xff]
    %v93 = vld [vmem:[#allocation5 + $0x28] sm:$0xff]
    %v94 = vld [vmem:[#allocation5 + $0x30] sm:$0xff]
    %v95 = vld [vmem:[#allocation5 + $0x38] sm:$0xff]
    %v96 = vld [vmem:[#allocation5 + $0x40] sm:$0xff]
    %v97 = vld [vmem:[#allocation5 + $0x48] sm:$0xff]
    %v98 = vld [vmem:[#allocation5 + $0x50] sm:$0xff]
    %v99 = vld [vmem:[#allocation5 + $0x58] sm:$0xff]
    %v100 = vld [vmem:[#allocation5 + $0x60] sm:$0xff]
    %v101 = vld [vmem:[#allocation5 + $0x68] sm:$0xff]
    %v102 = vld [vmem:[#allocation5 + $0x70] sm:$0xff]
    %v103 = vld [vmem:[#allocation5 + $0x78] sm:$0xff]
    %v104 = vld [vmem:[#allocation7] sm:$0xff]
    %v105 = vld [vmem:[#allocation7 + $0x8] sm:$0xff]
    %v106 = vld [vmem:[#allocation7 + $0x10] sm:$0xff]
    %v107 = vld [vmem:[#allocation7 + $0x18] sm:$0xff]
    %v108 = vld [vmem:[#allocation7 + $0x20] sm:$0xff]
    %v109 = vld [vmem:[#allocation7 + $0x28] sm:$0xff]
    %v110 = vld [vmem:[#allocation7 + $0x30] sm:$0xff]
    %v111 = vld [vmem:[#allocation7 + $0x38] sm:$0xff]
    %v112 = vld [vmem:[#allocation7 + $0x40] sm:$0xff]
    %v113 = vld [vmem:[#allocation7 + $0x48] sm:$0xff]
    %v114 = vld [vmem:[#allocation7 + $0x50] sm:$0xff]
    %v115 = vld [vmem:[#allocation7 + $0x58] sm:$0xff]
    %v116 = vld [vmem:[#allocation7 + $0x60] sm:$0xff]
    %v117 = vld [vmem:[#allocation7 + $0x68] sm:$0xff]
    %v118 = vld [vmem:[#allocation7 + $0x70] sm:$0xff]
    %v119 = vld [vmem:[#allocation7 + $0x78] sm:$0xff]
    %v120 = vmul.f32 %v72, %v88
    %v121 = vmul.f32 %v73, %v89
    %v122 = vmul.f32 %v72, %v90
    %v123 = vmul.f32 %v73, %v91
    %v124 = vmul.f32 %v72, %v92
    %v125 = vmul.f32 %v73, %v93
    %v126 = vmul.f32 %v72, %v94
    %v127 = vmul.f32 %v73, %v95
    %v128 = vmul.f32 %v72, %v96
    %v129 = vmul.f32 %v73, %v97
    %v130 = vmul.f32 %v72, %v98
    %v131 = vmul.f32 %v73, %v99
    %v132 = vmul.f32 %v72, %v100
    %v133 = vmul.f32 %v73, %v101
    %v134 = vmul.f32 %v72, %v102
    %v135 = vmul.f32 %v73, %v103
    %vm136 = vcmask 130048
    %v137 = vsel %vm136, %v120, 0.0
    %v138 = vsel %vm136, %v121, 0.0
    %v139 = vadd.f32 %v137, %v138
    %v140 = vrot.slane %v139, 4
    %v141 = vadd.f32 %v139, %v140
    %v142 = vrot.slane %v141, 2
    %v143 = vadd.f32 %v141, %v142
    %v144 = vrot.slane %v143, 1
    %v145 = vadd.f32 %v143, %v144
    %v146 = vsel %vm136, %v122, 0.0
    %v147 = vsel %vm136, %v123, 0.0
    %v148 = vadd.f32 %v146, %v147
    %v149 = vrot.slane %v148, 4
    %v150 = vadd.f32 %v148, %v149
    %v151 = vrot.slane %v150, 2
    %v152 = vadd.f32 %v150, %v151
    %v153 = vrot.slane %v152, 1
    %v154 = vadd.f32 %v152, %v153
    %v155 = vsel %vm136, %v124, 0.0
    %v156 = vsel %vm136, %v125, 0.0
    %v157 = vadd.f32 %v155, %v156
    %v158 = vrot.slane %v157, 4
    %v159 = vadd.f32 %v157, %v158
    %v160 = vrot.slane %v159, 2
    %v161 = vadd.f32 %v159, %v160
    %v162 = vrot.slane %v161, 1
    %v163 = vadd.f32 %v161, %v162
    %v164 = vsel %vm136, %v126, 0.0
    %v165 = vsel %vm136, %v127, 0.0
    %v166 = vadd.f32 %v164, %v165
    %v167 = vrot.slane %v166, 4
    %v168 = vadd.f32 %v166, %v167
    %v169 = vrot.slane %v168, 2
    %v170 = vadd.f32 %v168, %v169
    %v171 = vrot.slane %v170, 1
    %v172 = vadd.f32 %v170, %v171
    %v173 = vsel %vm136, %v128, 0.0
    %v174 = vsel %vm136, %v129, 0.0
    %v175 = vadd.f32 %v173, %v174
    %v176 = vrot.slane %v175, 4
    %v177 = vadd.f32 %v175, %v176
    %v178 = vrot.slane %v177, 2
    %v179 = vadd.f32 %v177, %v178
    %v180 = vrot.slane %v179, 1
    %v181 = vadd.f32 %v179, %v180
    %v182 = vsel %vm136, %v130, 0.0
    %v183 = vsel %vm136, %v131, 0.0
    %v184 = vadd.f32 %v182, %v183
    %v185 = vrot.slane %v184, 4
    %v186 = vadd.f32 %v184, %v185
    %v187 = vrot.slane %v186, 2
    %v188 = vadd.f32 %v186, %v187
    %v189 = vrot.slane %v188, 1
    %v190 = vadd.f32 %v188, %v189
    %v191 = vsel %vm136, %v132, 0.0
    %v192 = vsel %vm136, %v133, 0.0
    %v193 = vadd.f32 %v191, %v192
    %v194 = vrot.slane %v193, 4
    %v195 = vadd.f32 %v193, %v194
    %v196 = vrot.slane %v195, 2
    %v197 = vadd.f32 %v195, %v196
    %v198 = vrot.slane %v197, 1
    %v199 = vadd.f32 %v197, %v198
    %v200 = vsel %vm136, %v134, 0.0
    %v201 = vsel %vm136, %v135, 0.0
    %v202 = vadd.f32 %v200, %v201
    %v203 = vrot.slane %v202, 4
    %v204 = vadd.f32 %v202, %v203
    %v205 = vrot.slane %v204, 2
    %v206 = vadd.f32 %v204, %v205
    %v207 = vrot.slane %v206, 1
    %v208 = vadd.f32 %v206, %v207
    %v209 = vsel %vm136, %v145, -inf
    %v210 = vsel %vm136, %v154, -inf
    %v211 = vsel %vm136, %v163, -inf
    %v212 = vsel %vm136, %v172, -inf
    %v213 = vsel %vm136, %v181, -inf
    %v214 = vmax.f32 %v209, %v213
    %v215 = vsel %vm136, %v190, -inf
    %v216 = vmax.f32 %v210, %v215
    %v217 = vsel %vm136, %v199, -inf
    %v218 = vmax.f32 %v211, %v217
    %v219 = vsel %vm136, %v208, -inf
    %v220 = vmax.f32 %v212, %v219
    %v221 = vmax.f32 %v214, %v216
    %v222 = vmax.f32 %v218, %v220
    %v223 = vmax.f32 %v221, %v222
    %v224 = vsub.f32 %v145, %v223
    %v225 = vsub.f32 %v154, %v223
    %v226 = vsub.f32 %v163, %v223
    %v227 = vsub.f32 %v172, %v223
    %v228 = vsub.f32 %v181, %v223
    %v229 = vsub.f32 %v190, %v223
    %v230 = vsub.f32 %v199, %v223
    %v231 = vsub.f32 %v208, %v223
    %v232 = vmul.f32 %v224, 1.442695
    %v233 = vpow.pop %v232
    %v234 = vmul.f32 %v225, 1.442695
    %v235 = vpow.pop %v234
    %v236 = vmul.f32 %v226, 1.442695
    %v237 = vpow.pop %v236
    %v238 = vmul.f32 %v227, 1.442695
    %v239 = vpow.pop %v238
    %v240 = vmul.f32 %v228, 1.442695
    %v241 = vpow.pop %v240
    %v242 = vmul.f32 %v229, 1.442695
    %v243 = vpow.pop %v242
    %v244 = vmul.f32 %v230, 1.442695
    %v245 = vpow.pop %v244
    %v246 = vmul.f32 %v231, 1.442695
    %v247 = vpow.pop %v246
    %v256 = vrot.slane %v235, 7
    %vm257 = vcmask 1041409
    %v258 = vsel %vm257, %v256, %v233
    %v259 = vrot.slane %v237, 6
    %vm260 = vcmask 1042434
    %v261 = vsel %vm260, %v259, %v258
    %v262 = vrot.slane %v239, 5
    %vm263 = vcmask 1043459
    %v264 = vsel %vm263, %v262, %v261
    %v265 = vrot.slane %v241, 4
    %vm266 = vcmask 1044484
    %v267 = vsel %vm266, %v265, %v264
    %v268 = vrot.slane %v243, 3
    %vm269 = vcmask 1045509
    %v270 = vsel %vm269, %v268, %v267
    %v271 = vrot.slane %v245, 2
    %vm272 = vcmask 1046534
    %v273 = vsel %vm272, %v271, %v270
    %v274 = vrot.slane %v247, 1
    %vm275 = vcmask 1047559
    %v276 = vsel %vm275, %v274, %v273
    %v278 = vsel %vm136, %v276, 0.0
    %v279 = vrot.slane %v278, 4
    %v280 = vadd.f32 %v278, %v279
    %v281 = vrot.slane %v280, 2
    %v282 = vadd.f32 %v280, %v281
    %v283 = vrot.slane %v282, 1
    %v284 = vadd.f32 %v282, %v283
    %v285 = vlaneseq
    %v286 = vshrl.u32 %v285, 7
    %v287 = vsub.s32 0, %v286
    %v288 = vrot.slane %v233, %v287
    %v289 = vlaneseq
    %v290 = vshrl.u32 %v289, 7
    %v291 = vsub.s32 0, %v290
    %v292 = vrot.slane %v235, %v291
    %v293 = vlaneseq
    %v294 = vshrl.u32 %v293, 7
    %v295 = vsub.s32 0, %v294
    %v296 = vrot.slane %v237, %v295
    %v297 = vlaneseq
    %v298 = vshrl.u32 %v297, 7
    %v299 = vsub.s32 0, %v298
    %v300 = vrot.slane %v239, %v299
    %v301 = vlaneseq
    %v302 = vshrl.u32 %v301, 7
    %v303 = vsub.s32 0, %v302
    %v304 = vrot.slane %v241, %v303
    %v305 = vlaneseq
    %v306 = vshrl.u32 %v305, 7
    %v307 = vsub.s32 0, %v306
    %v308 = vrot.slane %v243, %v307
    %v309 = vlaneseq
    %v310 = vshrl.u32 %v309, 7
    %v311 = vsub.s32 0, %v310
    %v312 = vrot.slane %v245, %v311
    %v313 = vlaneseq
    %v314 = vshrl.u32 %v313, 7
    %v315 = vsub.s32 0, %v314
    %v316 = vrot.slane %v247, %v315
    %v317 = vmul.f32 %v288, %v104
    %v318 = vmul.f32 %v288, %v105
    %v319 = vmul.f32 %v292, %v106
    %v320 = vmul.f32 %v292, %v107
    %v321 = vmul.f32 %v296, %v108
    %v322 = vmul.f32 %v296, %v109
    %v323 = vmul.f32 %v300, %v110
    %v324 = vmul.f32 %v300, %v111
    %v325 = vmul.f32 %v304, %v112
    %v326 = vmul.f32 %v304, %v113
    %v327 = vmul.f32 %v308, %v114
    %v328 = vmul.f32 %v308, %v115
    %v329 = vmul.f32 %v312, %v116
    %v330 = vmul.f32 %v312, %v117
    %v331 = vmul.f32 %v316, %v118
    %v332 = vmul.f32 %v316, %v119
    %v333 = vsel %vm136, %v317, 0.0
    %v334 = vsel %vm136, %v319, 0.0
    %v335 = vadd.f32 %v333, %v334
    %v336 = vsel %vm136, %v321, 0.0
    %v337 = vadd.f32 %v335, %v336
    %v338 = vsel %vm136, %v323, 0.0
    %v339 = vadd.f32 %v337, %v338
    %v340 = vsel %vm136, %v325, 0.0
    %v341 = vadd.f32 %v339, %v340
    %v342 = vsel %vm136, %v327, 0.0
    %v343 = vadd.f32 %v341, %v342
    %v344 = vsel %vm136, %v329, 0.0
    %v345 = vadd.f32 %v343, %v344
    %v346 = vsel %vm136, %v331, 0.0
    %v347 = vadd.f32 %v345, %v346
    %v348 = vsel %vm136, %v318, 0.0
    %v349 = vsel %vm136, %v320, 0.0
    %v350 = vadd.f32 %v348, %v349
    %v351 = vsel %vm136, %v322, 0.0
    %v352 = vadd.f32 %v350, %v351
    %v353 = vsel %vm136, %v324, 0.0
    %v354 = vadd.f32 %v352, %v353
    %v355 = vsel %vm136, %v326, 0.0
    %v356 = vadd.f32 %v354, %v355
    %v357 = vsel %vm136, %v328, 0.0
    %v358 = vadd.f32 %v356, %v357
    %v359 = vsel %vm136, %v330, 0.0
    %v360 = vadd.f32 %v358, %v359
    %v361 = vsel %vm136, %v332, 0.0
    %v362 = vadd.f32 %v360, %v361
    %v363 = vrcp.pop %v284
    %v364 = vmul.f32 1.0, %v363
    %v365 = vlaneseq
    %v366 = vshrl.u32 %v365, 7
    %v367 = vsub.s32 0, %v366
    %v368 = vrot.slane %v364, %v367
    %v369 = vmul.f32 %v347, %v368
    %v370 = vmul.f32 %v362, %v368
    %371 = vst.msk [vmem:[#allocation8] sm:$0xff] %vm136, %v369
    %372 = vst.msk [vmem:[#allocation8 + $0x8] sm:$0xff] %vm136, %v370
    %v373 = vmul.f32 %v74, %v88
    %v374 = vmul.f32 %v75, %v89
    %v375 = vmul.f32 %v74, %v90
    %v376 = vmul.f32 %v75, %v91
    %v377 = vmul.f32 %v74, %v92
    %v378 = vmul.f32 %v75, %v93
    %v379 = vmul.f32 %v74, %v94
    %v380 = vmul.f32 %v75, %v95
    %v381 = vmul.f32 %v74, %v96
    %v382 = vmul.f32 %v75, %v97
    %v383 = vmul.f32 %v74, %v98
    %v384 = vmul.f32 %v75, %v99
    %v385 = vmul.f32 %v74, %v100
    %v386 = vmul.f32 %v75, %v101
    %v387 = vmul.f32 %v74, %v102
    %v388 = vmul.f32 %v75, %v103
    %v389 = vsel %vm136, %v373, 0.0
    %v390 = vsel %vm136, %v374, 0.0
    %v391 = vadd.f32 %v389, %v390
    %v392 = vrot.slane %v391, 4
    %v393 = vadd.f32 %v391, %v392
    %v394 = vrot.slane %v393, 2
    %v395 = vadd.f32 %v393, %v394
    %v396 = vrot.slane %v395, 1
    %v397 = vadd.f32 %v395, %v396
    %v398 = vsel %vm136, %v375, 0.0
    %v399 = vsel %vm136, %v376, 0.0
    %v400 = vadd.f32 %v398, %v399
    %v401 = vrot.slane %v400, 4
    %v402 = vadd.f32 %v400, %v401
    %v403 = vrot.slane %v402, 2
    %v404 = vadd.f32 %v402, %v403
    %v405 = vrot.slane %v404, 1
    %v406 = vadd.f32 %v404, %v405
    %v407 = vsel %vm136, %v377, 0.0
    %v408 = vsel %vm136, %v378, 0.0
    %v409 = vadd.f32 %v407, %v408
    %v410 = vrot.slane %v409, 4
    %v411 = vadd.f32 %v409, %v410
    %v412 = vrot.slane %v411, 2
    %v413 = vadd.f32 %v411, %v412
    %v414 = vrot.slane %v413, 1
    %v415 = vadd.f32 %v413, %v414
    %v416 = vsel %vm136, %v379, 0.0
    %v417 = vsel %vm136, %v380, 0.0
    %v418 = vadd.f32 %v416, %v417
    %v419 = vrot.slane %v418, 4
    %v420 = vadd.f32 %v418, %v419
    %v421 = vrot.slane %v420, 2
    %v422 = vadd.f32 %v420, %v421
    %v423 = vrot.slane %v422, 1
    %v424 = vadd.f32 %v422, %v423
    %v425 = vsel %vm136, %v381, 0.0
    %v426 = vsel %vm136, %v382, 0.0
    %v427 = vadd.f32 %v425, %v426
    %v428 = vrot.slane %v427, 4
    %v429 = vadd.f32 %v427, %v428
    %v430 = vrot.slane %v429, 2
    %v431 = vadd.f32 %v429, %v430
    %v432 = vrot.slane %v431, 1
    %v433 = vadd.f32 %v431, %v432
    %v434 = vsel %vm136, %v383, 0.0
    %v435 = vsel %vm136, %v384, 0.0
    %v436 = vadd.f32 %v434, %v435
    %v437 = vrot.slane %v436, 4
    %v438 = vadd.f32 %v436, %v437
    %v439 = vrot.slane %v438, 2
    %v440 = vadd.f32 %v438, %v439
    %v441 = vrot.slane %v440, 1
    %v442 = vadd.f32 %v440, %v441
    %v443 = vsel %vm136, %v385, 0.0
    %v444 = vsel %vm136, %v386, 0.0
    %v445 = vadd.f32 %v443, %v444
    %v446 = vrot.slane %v445, 4
    %v447 = vadd.f32 %v445, %v446
    %v448 = vrot.slane %v447, 2
    %v449 = vadd.f32 %v447, %v448
    %v450 = vrot.slane %v449, 1
    %v451 = vadd.f32 %v449, %v450
    %v452 = vsel %vm136, %v387, 0.0
    %v453 = vsel %vm136, %v388, 0.0
    %v454 = vadd.f32 %v452, %v453
    %v455 = vrot.slane %v454, 4
    %v456 = vadd.f32 %v454, %v455
    %v457 = vrot.slane %v456, 2
    %v458 = vadd.f32 %v456, %v457
    %v459 = vrot.slane %v458, 1
    %v460 = vadd.f32 %v458, %v459
    %v461 = vsel %vm136, %v397, -inf
    %v462 = vsel %vm136, %v406, -inf
    %v463 = vsel %vm136, %v415, -inf
    %v464 = vsel %vm136, %v424, -inf
    %v465 = vsel %vm136, %v433, -inf
    %v466 = vmax.f32 %v461, %v465
    %v467 = vsel %vm136, %v442, -inf
    %v468 = vmax.f32 %v462, %v467
    %v469 = vsel %vm136, %v451, -inf
    %v470 = vmax.f32 %v463, %v469
    %v471 = vsel %vm136, %v460, -inf
    %v472 = vmax.f32 %v464, %v471
    %v473 = vmax.f32 %v466, %v468
    %v474 = vmax.f32 %v470, %v472
    %v475 = vmax.f32 %v473, %v474
    %v476 = vsub.f32 %v397, %v475
    %v477 = vsub.f32 %v406, %v475
    %v478 = vsub.f32 %v415, %v475
    %v479 = vsub.f32 %v424, %v475
    %v480 = vsub.f32 %v433, %v475
    %v481 = vsub.f32 %v442, %v475
    %v482 = vsub.f32 %v451, %v475
    %v483 = vsub.f32 %v460, %v475
    %v484 = vmul.f32 %v476, 1.442695
    %v485 = vpow.pop %v484
    %v486 = vmul.f32 %v477, 1.442695
    %v487 = vpow.pop %v486
    %v488 = vmul.f32 %v478, 1.442695
    %v489 = vpow.pop %v488
    %v490 = vmul.f32 %v479, 1.442695
    %v491 = vpow.pop %v490
    %v492 = vmul.f32 %v480, 1.442695
    %v493 = vpow.pop %v492
    %v494 = vmul.f32 %v481, 1.442695
    %v495 = vpow.pop %v494
    %v496 = vmul.f32 %v482, 1.442695
    %v497 = vpow.pop %v496
    %v498 = vmul.f32 %v483, 1.442695
    %v499 = vpow.pop %v498
    %v508 = vrot.slane %v487, 7
    %v509 = vsel %vm257, %v508, %v485
    %v510 = vrot.slane %v489, 6
    %v511 = vsel %vm260, %v510, %v509
    %v512 = vrot.slane %v491, 5
    %v513 = vsel %vm263, %v512, %v511
    %v514 = vrot.slane %v493, 4
    %v515 = vsel %vm266, %v514, %v513
    %v516 = vrot.slane %v495, 3
    %v517 = vsel %vm269, %v516, %v515
    %v518 = vrot.slane %v497, 2
    %v519 = vsel %vm272, %v518, %v517
    %v520 = vrot.slane %v499, 1
    %v521 = vsel %vm275, %v520, %v519
    %v523 = vsel %vm136, %v521, 0.0
    %v524 = vrot.slane %v523, 4
    %v525 = vadd.f32 %v523, %v524
    %v526 = vrot.slane %v525, 2
    %v527 = vadd.f32 %v525, %v526
    %v528 = vrot.slane %v527, 1
    %v529 = vadd.f32 %v527, %v528
    %v530 = vlaneseq
    %v531 = vshrl.u32 %v530, 7
    %v532 = vsub.s32 0, %v531
    %v533 = vrot.slane %v485, %v532
    %v534 = vlaneseq
    %v535 = vshrl.u32 %v534, 7
    %v536 = vsub.s32 0, %v535
    %v537 = vrot.slane %v487, %v536
    %v538 = vlaneseq
    %v539 = vshrl.u32 %v538, 7
    %v540 = vsub.s32 0, %v539
    %v541 = vrot.slane %v489, %v540
    %v542 = vlaneseq
    %v543 = vshrl.u32 %v542, 7
    %v544 = vsub.s32 0, %v543
    %v545 = vrot.slane %v491, %v544
    %v546 = vlaneseq
    %v547 = vshrl.u32 %v546, 7
    %v548 = vsub.s32 0, %v547
    %v549 = vrot.slane %v493, %v548
    %v550 = vlaneseq
    %v551 = vshrl.u32 %v550, 7
    %v552 = vsub.s32 0, %v551
    %v553 = vrot.slane %v495, %v552
    %v554 = vlaneseq
    %v555 = vshrl.u32 %v554, 7
    %v556 = vsub.s32 0, %v555
    %v557 = vrot.slane %v497, %v556
    %v558 = vlaneseq
    %v559 = vshrl.u32 %v558, 7
    %v560 = vsub.s32 0, %v559
    %v561 = vrot.slane %v499, %v560
    %v562 = vmul.f32 %v533, %v104
    %v563 = vmul.f32 %v533, %v105
    %v564 = vmul.f32 %v537, %v106
    %v565 = vmul.f32 %v537, %v107
    %v566 = vmul.f32 %v541, %v108
    %v567 = vmul.f32 %v541, %v109
    %v568 = vmul.f32 %v545, %v110
    %v569 = vmul.f32 %v545, %v111
    %v570 = vmul.f32 %v549, %v112
    %v571 = vmul.f32 %v549, %v113
    %v572 = vmul.f32 %v553, %v114
    %v573 = vmul.f32 %v553, %v115
    %v574 = vmul.f32 %v557, %v116
    %v575 = vmul.f32 %v557, %v117
    %v576 = vmul.f32 %v561, %v118
    %v577 = vmul.f32 %v561, %v119
    %v578 = vsel %vm136, %v562, 0.0
    %v579 = vsel %vm136, %v564, 0.0
    %v580 = vadd.f32 %v578, %v579
    %v581 = vsel %vm136, %v566, 0.0
    %v582 = vadd.f32 %v580, %v581
    %v583 = vsel %vm136, %v568, 0.0
    %v584 = vadd.f32 %v582, %v583
    %v585 = vsel %vm136, %v570, 0.0
    %v586 = vadd.f32 %v584, %v585
    %v587 = vsel %vm136, %v572, 0.0
    %v588 = vadd.f32 %v586, %v587
    %v589 = vsel %vm136, %v574, 0.0
    %v590 = vadd.f32 %v588, %v589
    %v591 = vsel %vm136, %v576, 0.0
    %v592 = vadd.f32 %v590, %v591
    %v593 = vsel %vm136, %v563, 0.0
    %v594 = vsel %vm136, %v565, 0.0
    %v595 = vadd.f32 %v593, %v594
    %v596 = vsel %vm136, %v567, 0.0
    %v597 = vadd.f32 %v595, %v596
    %v598 = vsel %vm136, %v569, 0.0
    %v599 = vadd.f32 %v597, %v598
    %v600 = vsel %vm136, %v571, 0.0
    %v601 = vadd.f32 %v599, %v600
    %v602 = vsel %vm136, %v573, 0.0
    %v603 = vadd.f32 %v601, %v602
    %v604 = vsel %vm136, %v575, 0.0
    %v605 = vadd.f32 %v603, %v604
    %v606 = vsel %vm136, %v577, 0.0
    %v607 = vadd.f32 %v605, %v606
    %v608 = vrcp.pop %v529
    %v609 = vmul.f32 1.0, %v608
    %v610 = vlaneseq
    %v611 = vshrl.u32 %v610, 7
    %v612 = vsub.s32 0, %v611
    %v613 = vrot.slane %v609, %v612
    %v614 = vmul.f32 %v592, %v613
    %v615 = vmul.f32 %v607, %v613
    %s616 = scalar_lea.vmem [#allocation8], 16
    %617 = vst.msk [vmem:[%s616] sm:$0xff] %vm136, %v614
    %618 = vst.msk [vmem:[%s616 + $0x8] sm:$0xff] %vm136, %v615
    %v619 = vmul.f32 %v76, %v88
    %v620 = vmul.f32 %v77, %v89
    %v621 = vmul.f32 %v76, %v90
    %v622 = vmul.f32 %v77, %v91
    %v623 = vmul.f32 %v76, %v92
    %v624 = vmul.f32 %v77, %v93
    %v625 = vmul.f32 %v76, %v94
    %v626 = vmul.f32 %v77, %v95
    %v627 = vmul.f32 %v76, %v96
    %v628 = vmul.f32 %v77, %v97
    %v629 = vmul.f32 %v76, %v98
    %v630 = vmul.f32 %v77, %v99
    %v631 = vmul.f32 %v76, %v100
    %v632 = vmul.f32 %v77, %v101
    %v633 = vmul.f32 %v76, %v102
    %v634 = vmul.f32 %v77, %v103
    %v635 = vsel %vm136, %v619, 0.0
    %v636 = vsel %vm136, %v620, 0.0
    %v637 = vadd.f32 %v635, %v636
    %v638 = vrot.slane %v637, 4
    %v639 = vadd.f32 %v637, %v638
    %v640 = vrot.slane %v639, 2
    %v641 = vadd.f32 %v639, %v640
    %v642 = vrot.slane %v641, 1
    %v643 = vadd.f32 %v641, %v642
    %v644 = vsel %vm136, %v621, 0.0
    %v645 = vsel %vm136, %v622, 0.0
    %v646 = vadd.f32 %v644, %v645
    %v647 = vrot.slane %v646, 4
    %v648 = vadd.f32 %v646, %v647
    %v649 = vrot.slane %v648, 2
    %v650 = vadd.f32 %v648, %v649
    %v651 = vrot.slane %v650, 1
    %v652 = vadd.f32 %v650, %v651
    %v653 = vsel %vm136, %v623, 0.0
    %v654 = vsel %vm136, %v624, 0.0
    %v655 = vadd.f32 %v653, %v654
    %v656 = vrot.slane %v655, 4
    %v657 = vadd.f32 %v655, %v656
    %v658 = vrot.slane %v657, 2
    %v659 = vadd.f32 %v657, %v658
    %v660 = vrot.slane %v659, 1
    %v661 = vadd.f32 %v659, %v660
    %v662 = vsel %vm136, %v625, 0.0
    %v663 = vsel %vm136, %v626, 0.0
    %v664 = vadd.f32 %v662, %v663
    %v665 = vrot.slane %v664, 4
    %v666 = vadd.f32 %v664, %v665
    %v667 = vrot.slane %v666, 2
    %v668 = vadd.f32 %v666, %v667
    %v669 = vrot.slane %v668, 1
    %v670 = vadd.f32 %v668, %v669
    %v671 = vsel %vm136, %v627, 0.0
    %v672 = vsel %vm136, %v628, 0.0
    %v673 = vadd.f32 %v671, %v672
    %v674 = vrot.slane %v673, 4
    %v675 = vadd.f32 %v673, %v674
    %v676 = vrot.slane %v675, 2
    %v677 = vadd.f32 %v675, %v676
    %v678 = vrot.slane %v677, 1
    %v679 = vadd.f32 %v677, %v678
    %v680 = vsel %vm136, %v629, 0.0
    %v681 = vsel %vm136, %v630, 0.0
    %v682 = vadd.f32 %v680, %v681
    %v683 = vrot.slane %v682, 4
    %v684 = vadd.f32 %v682, %v683
    %v685 = vrot.slane %v684, 2
    %v686 = vadd.f32 %v684, %v685
    %v687 = vrot.slane %v686, 1
    %v688 = vadd.f32 %v686, %v687
    %v689 = vsel %vm136, %v631, 0.0
    %v690 = vsel %vm136, %v632, 0.0
    %v691 = vadd.f32 %v689, %v690
    %v692 = vrot.slane %v691, 4
    %v693 = vadd.f32 %v691, %v692
    %v694 = vrot.slane %v693, 2
    %v695 = vadd.f32 %v693, %v694
    %v696 = vrot.slane %v695, 1
    %v697 = vadd.f32 %v695, %v696
    %v698 = vsel %vm136, %v633, 0.0
    %v699 = vsel %vm136, %v634, 0.0
    %v700 = vadd.f32 %v698, %v699
    %v701 = vrot.slane %v700, 4
    %v702 = vadd.f32 %v700, %v701
    %v703 = vrot.slane %v702, 2
    %v704 = vadd.f32 %v702, %v703
    %v705 = vrot.slane %v704, 1
    %v706 = vadd.f32 %v704, %v705
    %v707 = vsel %vm136, %v643, -inf
    %v708 = vsel %vm136, %v652, -inf
    %v709 = vsel %vm136, %v661, -inf
    %v710 = vsel %vm136, %v670, -inf
    %v711 = vsel %vm136, %v679, -inf
    %v712 = vmax.f32 %v707, %v711
    %v713 = vsel %vm136, %v688, -inf
    %v714 = vmax.f32 %v708, %v713
    %v715 = vsel %vm136, %v697, -inf
    %v716 = vmax.f32 %v709, %v715
    %v717 = vsel %vm136, %v706, -inf
    %v718 = vmax.f32 %v710, %v717
    %v719 = vmax.f32 %v712, %v714
    %v720 = vmax.f32 %v716, %v718
    %v721 = vmax.f32 %v719, %v720
    %v722 = vsub.f32 %v643, %v721
    %v723 = vsub.f32 %v652, %v721
    %v724 = vsub.f32 %v661, %v721
    %v725 = vsub.f32 %v670, %v721
    %v726 = vsub.f32 %v679, %v721
    %v727 = vsub.f32 %v688, %v721
    %v728 = vsub.f32 %v697, %v721
    %v729 = vsub.f32 %v706, %v721
    %v730 = vmul.f32 %v722, 1.442695
    %v731 = vpow.pop %v730
    %v732 = vmul.f32 %v723, 1.442695
    %v733 = vpow.pop %v732
    %v734 = vmul.f32 %v724, 1.442695
    %v735 = vpow.pop %v734
    %v736 = vmul.f32 %v725, 1.442695
    %v737 = vpow.pop %v736
    %v738 = vmul.f32 %v726, 1.442695
    %v739 = vpow.pop %v738
    %v740 = vmul.f32 %v727, 1.442695
    %v741 = vpow.pop %v740
    %v742 = vmul.f32 %v728, 1.442695
    %v743 = vpow.pop %v742
    %v744 = vmul.f32 %v729, 1.442695
    %v745 = vpow.pop %v744
    %v754 = vrot.slane %v733, 7
    %v755 = vsel %vm257, %v754, %v731
    %v756 = vrot.slane %v735, 6
    %v757 = vsel %vm260, %v756, %v755
    %v758 = vrot.slane %v737, 5
    %v759 = vsel %vm263, %v758, %v757
    %v760 = vrot.slane %v739, 4
    %v761 = vsel %vm266, %v760, %v759
    %v762 = vrot.slane %v741, 3
    %v763 = vsel %vm269, %v762, %v761
    %v764 = vrot.slane %v743, 2
    %v765 = vsel %vm272, %v764, %v763
    %v766 = vrot.slane %v745, 1
    %v767 = vsel %vm275, %v766, %v765
    %v769 = vsel %vm136, %v767, 0.0
    %v770 = vrot.slane %v769, 4
    %v771 = vadd.f32 %v769, %v770
    %v772 = vrot.slane %v771, 2
    %v773 = vadd.f32 %v771, %v772
    %v774 = vrot.slane %v773, 1
    %v775 = vadd.f32 %v773, %v774
    %v776 = vlaneseq
    %v777 = vshrl.u32 %v776, 7
    %v778 = vsub.s32 0, %v777
    %v779 = vrot.slane %v731, %v778
    %v780 = vlaneseq
    %v781 = vshrl.u32 %v780, 7
    %v782 = vsub.s32 0, %v781
    %v783 = vrot.slane %v733, %v782
    %v784 = vlaneseq
    %v785 = vshrl.u32 %v784, 7
    %v786 = vsub.s32 0, %v785
    %v787 = vrot.slane %v735, %v786
    %v788 = vlaneseq
    %v789 = vshrl.u32 %v788, 7
    %v790 = vsub.s32 0, %v789
    %v791 = vrot.slane %v737, %v790
    %v792 = vlaneseq
    %v793 = vshrl.u32 %v792, 7
    %v794 = vsub.s32 0, %v793
    %v795 = vrot.slane %v739, %v794
    %v796 = vlaneseq
    %v797 = vshrl.u32 %v796, 7
    %v798 = vsub.s32 0, %v797
    %v799 = vrot.slane %v741, %v798
    %v800 = vlaneseq
    %v801 = vshrl.u32 %v800, 7
    %v802 = vsub.s32 0, %v801
    %v803 = vrot.slane %v743, %v802
    %v804 = vlaneseq
    %v805 = vshrl.u32 %v804, 7
    %v806 = vsub.s32 0, %v805
    %v807 = vrot.slane %v745, %v806
    %v808 = vmul.f32 %v779, %v104
    %v809 = vmul.f32 %v779, %v105
    %v810 = vmul.f32 %v783, %v106
    %v811 = vmul.f32 %v783, %v107
    %v812 = vmul.f32 %v787, %v108
    %v813 = vmul.f32 %v787, %v109
    %v814 = vmul.f32 %v791, %v110
    %v815 = vmul.f32 %v791, %v111
    %v816 = vmul.f32 %v795, %v112
    %v817 = vmul.f32 %v795, %v113
    %v818 = vmul.f32 %v799, %v114
    %v819 = vmul.f32 %v799, %v115
    %v820 = vmul.f32 %v803, %v116
    %v821 = vmul.f32 %v803, %v117
    %v822 = vmul.f32 %v807, %v118
    %v823 = vmul.f32 %v807, %v119
    %v824 = vsel %vm136, %v808, 0.0
    %v825 = vsel %vm136, %v810, 0.0
    %v826 = vadd.f32 %v824, %v825
    %v827 = vsel %vm136, %v812, 0.0
    %v828 = vadd.f32 %v826, %v827
    %v829 = vsel %vm136, %v814, 0.0
    %v830 = vadd.f32 %v828, %v829
    %v831 = vsel %vm136, %v816, 0.0
    %v832 = vadd.f32 %v830, %v831
    %v833 = vsel %vm136, %v818, 0.0
    %v834 = vadd.f32 %v832, %v833
    %v835 = vsel %vm136, %v820, 0.0
    %v836 = vadd.f32 %v834, %v835
    %v837 = vsel %vm136, %v822, 0.0
    %v838 = vadd.f32 %v836, %v837
    %v839 = vsel %vm136, %v809, 0.0
    %v840 = vsel %vm136, %v811, 0.0
    %v841 = vadd.f32 %v839, %v840
    %v842 = vsel %vm136, %v813, 0.0
    %v843 = vadd.f32 %v841, %v842
    %v844 = vsel %vm136, %v815, 0.0
    %v845 = vadd.f32 %v843, %v844
    %v846 = vsel %vm136, %v817, 0.0
    %v847 = vadd.f32 %v845, %v846
    %v848 = vsel %vm136, %v819, 0.0
    %v849 = vadd.f32 %v847, %v848
    %v850 = vsel %vm136, %v821, 0.0
    %v851 = vadd.f32 %v849, %v850
    %v852 = vsel %vm136, %v823, 0.0
    %v853 = vadd.f32 %v851, %v852
    %v854 = vrcp.pop %v775
    %v855 = vmul.f32 1.0, %v854
    %v856 = vlaneseq
    %v857 = vshrl.u32 %v856, 7
    %v858 = vsub.s32 0, %v857
    %v859 = vrot.slane %v855, %v858
    %v860 = vmul.f32 %v838, %v859
    %v861 = vmul.f32 %v853, %v859
    %s862 = scalar_lea.vmem [#allocation8], 32
    %863 = vst.msk [vmem:[%s862] sm:$0xff] %vm136, %v860
    %864 = vst.msk [vmem:[%s862 + $0x8] sm:$0xff] %vm136, %v861
    %v865 = vmul.f32 %v78, %v88
    %v866 = vmul.f32 %v79, %v89
    %v867 = vmul.f32 %v78, %v90
    %v868 = vmul.f32 %v79, %v91
    %v869 = vmul.f32 %v78, %v92
    %v870 = vmul.f32 %v79, %v93
    %v871 = vmul.f32 %v78, %v94
    %v872 = vmul.f32 %v79, %v95
    %v873 = vmul.f32 %v78, %v96
    %v874 = vmul.f32 %v79, %v97
    %v875 = vmul.f32 %v78, %v98
    %v876 = vmul.f32 %v79, %v99
    %v877 = vmul.f32 %v78, %v100
    %v878 = vmul.f32 %v79, %v101
    %v879 = vmul.f32 %v78, %v102
    %v880 = vmul.f32 %v79, %v103
    %v881 = vsel %vm136, %v865, 0.0
    %v882 = vsel %vm136, %v866, 0.0
    %v883 = vadd.f32 %v881, %v882
    %v884 = vrot.slane %v883, 4
    %v885 = vadd.f32 %v883, %v884
    %v886 = vrot.slane %v885, 2
    %v887 = vadd.f32 %v885, %v886
    %v888 = vrot.slane %v887, 1
    %v889 = vadd.f32 %v887, %v888
    %v890 = vsel %vm136, %v867, 0.0
    %v891 = vsel %vm136, %v868, 0.0
    %v892 = vadd.f32 %v890, %v891
    %v893 = vrot.slane %v892, 4
    %v894 = vadd.f32 %v892, %v893
    %v895 = vrot.slane %v894, 2
    %v896 = vadd.f32 %v894, %v895
    %v897 = vrot.slane %v896, 1
    %v898 = vadd.f32 %v896, %v897
    %v899 = vsel %vm136, %v869, 0.0
    %v900 = vsel %vm136, %v870, 0.0
    %v901 = vadd.f32 %v899, %v900
    %v902 = vrot.slane %v901, 4
    %v903 = vadd.f32 %v901, %v902
    %v904 = vrot.slane %v903, 2
    %v905 = vadd.f32 %v903, %v904
    %v906 = vrot.slane %v905, 1
    %v907 = vadd.f32 %v905, %v906
    %v908 = vsel %vm136, %v871, 0.0
    %v909 = vsel %vm136, %v872, 0.0
    %v910 = vadd.f32 %v908, %v909
    %v911 = vrot.slane %v910, 4
    %v912 = vadd.f32 %v910, %v911
    %v913 = vrot.slane %v912, 2
    %v914 = vadd.f32 %v912, %v913
    %v915 = vrot.slane %v914, 1
    %v916 = vadd.f32 %v914, %v915
    %v917 = vsel %vm136, %v873, 0.0
    %v918 = vsel %vm136, %v874, 0.0
    %v919 = vadd.f32 %v917, %v918
    %v920 = vrot.slane %v919, 4
    %v921 = vadd.f32 %v919, %v920
    %v922 = vrot.slane %v921, 2
    %v923 = vadd.f32 %v921, %v922
    %v924 = vrot.slane %v923, 1
    %v925 = vadd.f32 %v923, %v924
    %v926 = vsel %vm136, %v875, 0.0
    %v927 = vsel %vm136, %v876, 0.0
    %v928 = vadd.f32 %v926, %v927
    %v929 = vrot.slane %v928, 4
    %v930 = vadd.f32 %v928, %v929
    %v931 = vrot.slane %v930, 2
    %v932 = vadd.f32 %v930, %v931
    %v933 = vrot.slane %v932, 1
    %v934 = vadd.f32 %v932, %v933
    %v935 = vsel %vm136, %v877, 0.0
    %v936 = vsel %vm136, %v878, 0.0
    %v937 = vadd.f32 %v935, %v936
    %v938 = vrot.slane %v937, 4
    %v939 = vadd.f32 %v937, %v938
    %v940 = vrot.slane %v939, 2
    %v941 = vadd.f32 %v939, %v940
    %v942 = vrot.slane %v941, 1
    %v943 = vadd.f32 %v941, %v942
    %v944 = vsel %vm136, %v879, 0.0
    %v945 = vsel %vm136, %v880, 0.0
    %v946 = vadd.f32 %v944, %v945
    %v947 = vrot.slane %v946, 4
    %v948 = vadd.f32 %v946, %v947
    %v949 = vrot.slane %v948, 2
    %v950 = vadd.f32 %v948, %v949
    %v951 = vrot.slane %v950, 1
    %v952 = vadd.f32 %v950, %v951
    %v953 = vsel %vm136, %v889, -inf
    %v954 = vsel %vm136, %v898, -inf
    %v955 = vsel %vm136, %v907, -inf
    %v956 = vsel %vm136, %v916, -inf
    %v957 = vsel %vm136, %v925, -inf
    %v958 = vmax.f32 %v953, %v957
    %v959 = vsel %vm136, %v934, -inf
    %v960 = vmax.f32 %v954, %v959
    %v961 = vsel %vm136, %v943, -inf
    %v962 = vmax.f32 %v955, %v961
    %v963 = vsel %vm136, %v952, -inf
    %v964 = vmax.f32 %v956, %v963
    %v965 = vmax.f32 %v958, %v960
    %v966 = vmax.f32 %v962, %v964
    %v967 = vmax.f32 %v965, %v966
    %v968 = vsub.f32 %v889, %v967
    %v969 = vsub.f32 %v898, %v967
    %v970 = vsub.f32 %v907, %v967
    %v971 = vsub.f32 %v916, %v967
    %v972 = vsub.f32 %v925, %v967
    %v973 = vsub.f32 %v934, %v967
    %v974 = vsub.f32 %v943, %v967
    %v975 = vsub.f32 %v952, %v967
    %v976 = vmul.f32 %v968, 1.442695
    %v977 = vpow.pop %v976
    %v978 = vmul.f32 %v969, 1.442695
    %v979 = vpow.pop %v978
    %v980 = vmul.f32 %v970, 1.442695
    %v981 = vpow.pop %v980
    %v982 = vmul.f32 %v971, 1.442695
    %v983 = vpow.pop %v982
    %v984 = vmul.f32 %v972, 1.442695
    %v985 = vpow.pop %v984
    %v986 = vmul.f32 %v973, 1.442695
    %v987 = vpow.pop %v986
    %v988 = vmul.f32 %v974, 1.442695
    %v989 = vpow.pop %v988
    %v990 = vmul.f32 %v975, 1.442695
    %v991 = vpow.pop %v990
    %v1000 = vrot.slane %v979, 7
    %v1001 = vsel %vm257, %v1000, %v977
    %v1002 = vrot.slane %v981, 6
    %v1003 = vsel %vm260, %v1002, %v1001
    %v1004 = vrot.slane %v983, 5
    %v1005 = vsel %vm263, %v1004, %v1003
    %v1006 = vrot.slane %v985, 4
    %v1007 = vsel %vm266, %v1006, %v1005
    %v1008 = vrot.slane %v987, 3
    %v1009 = vsel %vm269, %v1008, %v1007
    %v1010 = vrot.slane %v989, 2
    %v1011 = vsel %vm272, %v1010, %v1009
    %v1012 = vrot.slane %v991, 1
    %v1013 = vsel %vm275, %v1012, %v1011
    %v1015 = vsel %vm136, %v1013, 0.0
    %v1016 = vrot.slane %v1015, 4
    %v1017 = vadd.f32 %v1015, %v1016
    %v1018 = vrot.slane %v1017, 2
    %v1019 = vadd.f32 %v1017, %v1018
    %v1020 = vrot.slane %v1019, 1
    %v1021 = vadd.f32 %v1019, %v1020
    %v1022 = vlaneseq
    %v1023 = vshrl.u32 %v1022, 7
    %v1024 = vsub.s32 0, %v1023
    %v1025 = vrot.slane %v977, %v1024
    %v1026 = vlaneseq
    %v1027 = vshrl.u32 %v1026, 7
    %v1028 = vsub.s32 0, %v1027
    %v1029 = vrot.slane %v979, %v1028
    %v1030 = vlaneseq
    %v1031 = vshrl.u32 %v1030, 7
    %v1032 = vsub.s32 0, %v1031
    %v1033 = vrot.slane %v981, %v1032
    %v1034 = vlaneseq
    %v1035 = vshrl.u32 %v1034, 7
    %v1036 = vsub.s32 0, %v1035
    %v1037 = vrot.slane %v983, %v1036
    %v1038 = vlaneseq
    %v1039 = vshrl.u32 %v1038, 7
    %v1040 = vsub.s32 0, %v1039
    %v1041 = vrot.slane %v985, %v1040
    %v1042 = vlaneseq
    %v1043 = vshrl.u32 %v1042, 7
    %v1044 = vsub.s32 0, %v1043
    %v1045 = vrot.slane %v987, %v1044
    %v1046 = vlaneseq
    %v1047 = vshrl.u32 %v1046, 7
    %v1048 = vsub.s32 0, %v1047
    %v1049 = vrot.slane %v989, %v1048
    %v1050 = vlaneseq
    %v1051 = vshrl.u32 %v1050, 7
    %v1052 = vsub.s32 0, %v1051
    %v1053 = vrot.slane %v991, %v1052
    %v1054 = vmul.f32 %v1025, %v104
    %v1055 = vmul.f32 %v1025, %v105
    %v1056 = vmul.f32 %v1029, %v106
    %v1057 = vmul.f32 %v1029, %v107
    %v1058 = vmul.f32 %v1033, %v108
    %v1059 = vmul.f32 %v1033, %v109
    %v1060 = vmul.f32 %v1037, %v110
    %v1061 = vmul.f32 %v1037, %v111
    %v1062 = vmul.f32 %v1041, %v112
    %v1063 = vmul.f32 %v1041, %v113
    %v1064 = vmul.f32 %v1045, %v114
    %v1065 = vmul.f32 %v1045, %v115
    %v1066 = vmul.f32 %v1049, %v116
    %v1067 = vmul.f32 %v1049, %v117
    %v1068 = vmul.f32 %v1053, %v118
    %v1069 = vmul.f32 %v1053, %v119
    %v1070 = vsel %vm136, %v1054, 0.0
    %v1071 = vsel %vm136, %v1056, 0.0
    %v1072 = vadd.f32 %v1070, %v1071
    %v1073 = vsel %vm136, %v1058, 0.0
    %v1074 = vadd.f32 %v1072, %v1073
    %v1075 = vsel %vm136, %v1060, 0.0
    %v1076 = vadd.f32 %v1074, %v1075
    %v1077 = vsel %vm136, %v1062, 0.0
    %v1078 = vadd.f32 %v1076, %v1077
    %v1079 = vsel %vm136, %v1064, 0.0
    %v1080 = vadd.f32 %v1078, %v1079
    %v1081 = vsel %vm136, %v1066, 0.0
    %v1082 = vadd.f32 %v1080, %v1081
    %v1083 = vsel %vm136, %v1068, 0.0
    %v1084 = vadd.f32 %v1082, %v1083
    %v1085 = vsel %vm136, %v1055, 0.0
    %v1086 = vsel %vm136, %v1057, 0.0
    %v1087 = vadd.f32 %v1085, %v1086
    %v1088 = vsel %vm136, %v1059, 0.0
    %v1089 = vadd.f32 %v1087, %v1088
    %v1090 = vsel %vm136, %v1061, 0.0
    %v1091 = vadd.f32 %v1089, %v1090
    %v1092 = vsel %vm136, %v1063, 0.0
    %v1093 = vadd.f32 %v1091, %v1092
    %v1094 = vsel %vm136, %v1065, 0.0
    %v1095 = vadd.f32 %v1093, %v1094
    %v1096 = vsel %vm136, %v1067, 0.0
    %v1097 = vadd.f32 %v1095, %v1096
    %v1098 = vsel %vm136, %v1069, 0.0
    %v1099 = vadd.f32 %v1097, %v1098
    %v1100 = vrcp.pop %v1021
    %v1101 = vmul.f32 1.0, %v1100
    %v1102 = vlaneseq
    %v1103 = vshrl.u32 %v1102, 7
    %v1104 = vsub.s32 0, %v1103
    %v1105 = vrot.slane %v1101, %v1104
    %v1106 = vmul.f32 %v1084, %v1105
    %v1107 = vmul.f32 %v1099, %v1105
    %s1108 = scalar_lea.vmem [#allocation8], 48
    %1109 = vst.msk [vmem:[%s1108] sm:$0xff] %vm136, %v1106
    %1110 = vst.msk [vmem:[%s1108 + $0x8] sm:$0xff] %vm136, %v1107
    %v1111 = vmul.f32 %v80, %v88
    %v1112 = vmul.f32 %v81, %v89
    %v1113 = vmul.f32 %v80, %v90
    %v1114 = vmul.f32 %v81, %v91
    %v1115 = vmul.f32 %v80, %v92
    %v1116 = vmul.f32 %v81, %v93
    %v1117 = vmul.f32 %v80, %v94
    %v1118 = vmul.f32 %v81, %v95
    %v1119 = vmul.f32 %v80, %v96
    %v1120 = vmul.f32 %v81, %v97
    %v1121 = vmul.f32 %v80, %v98
    %v1122 = vmul.f32 %v81, %v99
    %v1123 = vmul.f32 %v80, %v100
    %v1124 = vmul.f32 %v81, %v101
    %v1125 = vmul.f32 %v80, %v102
    %v1126 = vmul.f32 %v81, %v103
    %v1127 = vsel %vm136, %v1111, 0.0
    %v1128 = vsel %vm136, %v1112, 0.0
    %v1129 = vadd.f32 %v1127, %v1128
    %v1130 = vrot.slane %v1129, 4
    %v1131 = vadd.f32 %v1129, %v1130
    %v1132 = vrot.slane %v1131, 2
    %v1133 = vadd.f32 %v1131, %v1132
    %v1134 = vrot.slane %v1133, 1
    %v1135 = vadd.f32 %v1133, %v1134
    %v1136 = vsel %vm136, %v1113, 0.0
    %v1137 = vsel %vm136, %v1114, 0.0
    %v1138 = vadd.f32 %v1136, %v1137
    %v1139 = vrot.slane %v1138, 4
    %v1140 = vadd.f32 %v1138, %v1139
    %v1141 = vrot.slane %v1140, 2
    %v1142 = vadd.f32 %v1140, %v1141
    %v1143 = vrot.slane %v1142, 1
    %v1144 = vadd.f32 %v1142, %v1143
    %v1145 = vsel %vm136, %v1115, 0.0
    %v1146 = vsel %vm136, %v1116, 0.0
    %v1147 = vadd.f32 %v1145, %v1146
    %v1148 = vrot.slane %v1147, 4
    %v1149 = vadd.f32 %v1147, %v1148
    %v1150 = vrot.slane %v1149, 2
    %v1151 = vadd.f32 %v1149, %v1150
    %v1152 = vrot.slane %v1151, 1
    %v1153 = vadd.f32 %v1151, %v1152
    %v1154 = vsel %vm136, %v1117, 0.0
    %v1155 = vsel %vm136, %v1118, 0.0
    %v1156 = vadd.f32 %v1154, %v1155
    %v1157 = vrot.slane %v1156, 4
    %v1158 = vadd.f32 %v1156, %v1157
    %v1159 = vrot.slane %v1158, 2
    %v1160 = vadd.f32 %v1158, %v1159
    %v1161 = vrot.slane %v1160, 1
    %v1162 = vadd.f32 %v1160, %v1161
    %v1163 = vsel %vm136, %v1119, 0.0
    %v1164 = vsel %vm136, %v1120, 0.0
    %v1165 = vadd.f32 %v1163, %v1164
    %v1166 = vrot.slane %v1165, 4
    %v1167 = vadd.f32 %v1165, %v1166
    %v1168 = vrot.slane %v1167, 2
    %v1169 = vadd.f32 %v1167, %v1168
    %v1170 = vrot.slane %v1169, 1
    %v1171 = vadd.f32 %v1169, %v1170
    %v1172 = vsel %vm136, %v1121, 0.0
    %v1173 = vsel %vm136, %v1122, 0.0
    %v1174 = vadd.f32 %v1172, %v1173
    %v1175 = vrot.slane %v1174, 4
    %v1176 = vadd.f32 %v1174, %v1175
    %v1177 = vrot.slane %v1176, 2
    %v1178 = vadd.f32 %v1176, %v1177
    %v1179 = vrot.slane %v1178, 1
    %v1180 = vadd.f32 %v1178, %v1179
    %v1181 = vsel %vm136, %v1123, 0.0
    %v1182 = vsel %vm136, %v1124, 0.0
    %v1183 = vadd.f32 %v1181, %v1182
    %v1184 = vrot.slane %v1183, 4
    %v1185 = vadd.f32 %v1183, %v1184
    %v1186 = vrot.slane %v1185, 2
    %v1187 = vadd.f32 %v1185, %v1186
    %v1188 = vrot.slane %v1187, 1
    %v1189 = vadd.f32 %v1187, %v1188
    %v1190 = vsel %vm136, %v1125, 0.0
    %v1191 = vsel %vm136, %v1126, 0.0
    %v1192 = vadd.f32 %v1190, %v1191
    %v1193 = vrot.slane %v1192, 4
    %v1194 = vadd.f32 %v1192, %v1193
    %v1195 = vrot.slane %v1194, 2
    %v1196 = vadd.f32 %v1194, %v1195
    %v1197 = vrot.slane %v1196, 1
    %v1198 = vadd.f32 %v1196, %v1197
    %v1199 = vsel %vm136, %v1135, -inf
    %v1200 = vsel %vm136, %v1144, -inf
    %v1201 = vsel %vm136, %v1153, -inf
    %v1202 = vsel %vm136, %v1162, -inf
    %v1203 = vsel %vm136, %v1171, -inf
    %v1204 = vmax.f32 %v1199, %v1203
    %v1205 = vsel %vm136, %v1180, -inf
    %v1206 = vmax.f32 %v1200, %v1205
    %v1207 = vsel %vm136, %v1189, -inf
    %v1208 = vmax.f32 %v1201, %v1207
    %v1209 = vsel %vm136, %v1198, -inf
    %v1210 = vmax.f32 %v1202, %v1209
    %v1211 = vmax.f32 %v1204, %v1206
    %v1212 = vmax.f32 %v1208, %v1210
    %v1213 = vmax.f32 %v1211, %v1212
    %v1214 = vsub.f32 %v1135, %v1213
    %v1215 = vsub.f32 %v1144, %v1213
    %v1216 = vsub.f32 %v1153, %v1213
    %v1217 = vsub.f32 %v1162, %v1213
    %v1218 = vsub.f32 %v1171, %v1213
    %v1219 = vsub.f32 %v1180, %v1213
    %v1220 = vsub.f32 %v1189, %v1213
    %v1221 = vsub.f32 %v1198, %v1213
    %v1222 = vmul.f32 %v1214, 1.442695
    %v1223 = vpow.pop %v1222
    %v1224 = vmul.f32 %v1215, 1.442695
    %v1225 = vpow.pop %v1224
    %v1226 = vmul.f32 %v1216, 1.442695
    %v1227 = vpow.pop %v1226
    %v1228 = vmul.f32 %v1217, 1.442695
    %v1229 = vpow.pop %v1228
    %v1230 = vmul.f32 %v1218, 1.442695
    %v1231 = vpow.pop %v1230
    %v1232 = vmul.f32 %v1219, 1.442695
    %v1233 = vpow.pop %v1232
    %v1234 = vmul.f32 %v1220, 1.442695
    %v1235 = vpow.pop %v1234
    %v1236 = vmul.f32 %v1221, 1.442695
    %v1237 = vpow.pop %v1236
    %v1246 = vrot.slane %v1225, 7
    %v1247 = vsel %vm257, %v1246, %v1223
    %v1248 = vrot.slane %v1227, 6
    %v1249 = vsel %vm260, %v1248, %v1247
    %v1250 = vrot.slane %v1229, 5
    %v1251 = vsel %vm263, %v1250, %v1249
    %v1252 = vrot.slane %v1231, 4
    %v1253 = vsel %vm266, %v1252, %v1251
    %v1254 = vrot.slane %v1233, 3
    %v1255 = vsel %vm269, %v1254, %v1253
    %v1256 = vrot.slane %v1235, 2
    %v1257 = vsel %vm272, %v1256, %v1255
    %v1258 = vrot.slane %v1237, 1
    %v1259 = vsel %vm275, %v1258, %v1257
    %v1261 = vsel %vm136, %v1259, 0.0
    %v1262 = vrot.slane %v1261, 4
    %v1263 = vadd.f32 %v1261, %v1262
    %v1264 = vrot.slane %v1263, 2
    %v1265 = vadd.f32 %v1263, %v1264
    %v1266 = vrot.slane %v1265, 1
    %v1267 = vadd.f32 %v1265, %v1266
    %v1268 = vlaneseq
    %v1269 = vshrl.u32 %v1268, 7
    %v1270 = vsub.s32 0, %v1269
    %v1271 = vrot.slane %v1223, %v1270
    %v1272 = vlaneseq
    %v1273 = vshrl.u32 %v1272, 7
    %v1274 = vsub.s32 0, %v1273
    %v1275 = vrot.slane %v1225, %v1274
    %v1276 = vlaneseq
    %v1277 = vshrl.u32 %v1276, 7
    %v1278 = vsub.s32 0, %v1277
    %v1279 = vrot.slane %v1227, %v1278
    %v1280 = vlaneseq
    %v1281 = vshrl.u32 %v1280, 7
    %v1282 = vsub.s32 0, %v1281
    %v1283 = vrot.slane %v1229, %v1282
    %v1284 = vlaneseq
    %v1285 = vshrl.u32 %v1284, 7
    %v1286 = vsub.s32 0, %v1285
    %v1287 = vrot.slane %v1231, %v1286
    %v1288 = vlaneseq
    %v1289 = vshrl.u32 %v1288, 7
    %v1290 = vsub.s32 0, %v1289
    %v1291 = vrot.slane %v1233, %v1290
    %v1292 = vlaneseq
    %v1293 = vshrl.u32 %v1292, 7
    %v1294 = vsub.s32 0, %v1293
    %v1295 = vrot.slane %v1235, %v1294
    %v1296 = vlaneseq
    %v1297 = vshrl.u32 %v1296, 7
    %v1298 = vsub.s32 0, %v1297
    %v1299 = vrot.slane %v1237, %v1298
    %v1300 = vmul.f32 %v1271, %v104
    %v1301 = vmul.f32 %v1271, %v105
    %v1302 = vmul.f32 %v1275, %v106
    %v1303 = vmul.f32 %v1275, %v107
    %v1304 = vmul.f32 %v1279, %v108
    %v1305 = vmul.f32 %v1279, %v109
    %v1306 = vmul.f32 %v1283, %v110
    %v1307 = vmul.f32 %v1283, %v111
    %v1308 = vmul.f32 %v1287, %v112
    %v1309 = vmul.f32 %v1287, %v113
    %v1310 = vmul.f32 %v1291, %v114
    %v1311 = vmul.f32 %v1291, %v115
    %v1312 = vmul.f32 %v1295, %v116
    %v1313 = vmul.f32 %v1295, %v117
    %v1314 = vmul.f32 %v1299, %v118
    %v1315 = vmul.f32 %v1299, %v119
    %v1316 = vsel %vm136, %v1300, 0.0
    %v1317 = vsel %vm136, %v1302, 0.0
    %v1318 = vadd.f32 %v1316, %v1317
    %v1319 = vsel %vm136, %v1304, 0.0
    %v1320 = vadd.f32 %v1318, %v1319
    %v1321 = vsel %vm136, %v1306, 0.0
    %v1322 = vadd.f32 %v1320, %v1321
    %v1323 = vsel %vm136, %v1308, 0.0
    %v1324 = vadd.f32 %v1322, %v1323
    %v1325 = vsel %vm136, %v1310, 0.0
    %v1326 = vadd.f32 %v1324, %v1325
    %v1327 = vsel %vm136, %v1312, 0.0
    %v1328 = vadd.f32 %v1326, %v1327
    %v1329 = vsel %vm136, %v1314, 0.0
    %v1330 = vadd.f32 %v1328, %v1329
    %v1331 = vsel %vm136, %v1301, 0.0
    %v1332 = vsel %vm136, %v1303, 0.0
    %v1333 = vadd.f32 %v1331, %v1332
    %v1334 = vsel %vm136, %v1305, 0.0
    %v1335 = vadd.f32 %v1333, %v1334
    %v1336 = vsel %vm136, %v1307, 0.0
    %v1337 = vadd.f32 %v1335, %v1336
    %v1338 = vsel %vm136, %v1309, 0.0
    %v1339 = vadd.f32 %v1337, %v1338
    %v1340 = vsel %vm136, %v1311, 0.0
    %v1341 = vadd.f32 %v1339, %v1340
    %v1342 = vsel %vm136, %v1313, 0.0
    %v1343 = vadd.f32 %v1341, %v1342
    %v1344 = vsel %vm136, %v1315, 0.0
    %v1345 = vadd.f32 %v1343, %v1344
    %v1346 = vrcp.pop %v1267
    %v1347 = vmul.f32 1.0, %v1346
    %v1348 = vlaneseq
    %v1349 = vshrl.u32 %v1348, 7
    %v1350 = vsub.s32 0, %v1349
    %v1351 = vrot.slane %v1347, %v1350
    %v1352 = vmul.f32 %v1330, %v1351
    %v1353 = vmul.f32 %v1345, %v1351
    %s1354 = scalar_lea.vmem [#allocation8], 64
    %1355 = vst.msk [vmem:[%s1354] sm:$0xff] %vm136, %v1352
    %1356 = vst.msk [vmem:[%s1354 + $0x8] sm:$0xff] %vm136, %v1353
    %v1357 = vmul.f32 %v82, %v88
    %v1358 = vmul.f32 %v83, %v89
    %v1359 = vmul.f32 %v82, %v90
    %v1360 = vmul.f32 %v83, %v91
    %v1361 = vmul.f32 %v82, %v92
    %v1362 = vmul.f32 %v83, %v93
    %v1363 = vmul.f32 %v82, %v94
    %v1364 = vmul.f32 %v83, %v95
    %v1365 = vmul.f32 %v82, %v96
    %v1366 = vmul.f32 %v83, %v97
    %v1367 = vmul.f32 %v82, %v98
    %v1368 = vmul.f32 %v83, %v99
    %v1369 = vmul.f32 %v82, %v100
    %v1370 = vmul.f32 %v83, %v101
    %v1371 = vmul.f32 %v82, %v102
    %v1372 = vmul.f32 %v83, %v103
    %v1373 = vsel %vm136, %v1357, 0.0
    %v1374 = vsel %vm136, %v1358, 0.0
    %v1375 = vadd.f32 %v1373, %v1374
    %v1376 = vrot.slane %v1375, 4
    %v1377 = vadd.f32 %v1375, %v1376
    %v1378 = vrot.slane %v1377, 2
    %v1379 = vadd.f32 %v1377, %v1378
    %v1380 = vrot.slane %v1379, 1
    %v1381 = vadd.f32 %v1379, %v1380
    %v1382 = vsel %vm136, %v1359, 0.0
    %v1383 = vsel %vm136, %v1360, 0.0
    %v1384 = vadd.f32 %v1382, %v1383
    %v1385 = vrot.slane %v1384, 4
    %v1386 = vadd.f32 %v1384, %v1385
    %v1387 = vrot.slane %v1386, 2
    %v1388 = vadd.f32 %v1386, %v1387
    %v1389 = vrot.slane %v1388, 1
    %v1390 = vadd.f32 %v1388, %v1389
    %v1391 = vsel %vm136, %v1361, 0.0
    %v1392 = vsel %vm136, %v1362, 0.0
    %v1393 = vadd.f32 %v1391, %v1392
    %v1394 = vrot.slane %v1393, 4
    %v1395 = vadd.f32 %v1393, %v1394
    %v1396 = vrot.slane %v1395, 2
    %v1397 = vadd.f32 %v1395, %v1396
    %v1398 = vrot.slane %v1397, 1
    %v1399 = vadd.f32 %v1397, %v1398
    %v1400 = vsel %vm136, %v1363, 0.0
    %v1401 = vsel %vm136, %v1364, 0.0
    %v1402 = vadd.f32 %v1400, %v1401
    %v1403 = vrot.slane %v1402, 4
    %v1404 = vadd.f32 %v1402, %v1403
    %v1405 = vrot.slane %v1404, 2
    %v1406 = vadd.f32 %v1404, %v1405
    %v1407 = vrot.slane %v1406, 1
    %v1408 = vadd.f32 %v1406, %v1407
    %v1409 = vsel %vm136, %v1365, 0.0
    %v1410 = vsel %vm136, %v1366, 0.0
    %v1411 = vadd.f32 %v1409, %v1410
    %v1412 = vrot.slane %v1411, 4
    %v1413 = vadd.f32 %v1411, %v1412
    %v1414 = vrot.slane %v1413, 2
    %v1415 = vadd.f32 %v1413, %v1414
    %v1416 = vrot.slane %v1415, 1
    %v1417 = vadd.f32 %v1415, %v1416
    %v1418 = vsel %vm136, %v1367, 0.0
    %v1419 = vsel %vm136, %v1368, 0.0
    %v1420 = vadd.f32 %v1418, %v1419
    %v1421 = vrot.slane %v1420, 4
    %v1422 = vadd.f32 %v1420, %v1421
    %v1423 = vrot.slane %v1422, 2
    %v1424 = vadd.f32 %v1422, %v1423
    %v1425 = vrot.slane %v1424, 1
    %v1426 = vadd.f32 %v1424, %v1425
    %v1427 = vsel %vm136, %v1369, 0.0
    %v1428 = vsel %vm136, %v1370, 0.0
    %v1429 = vadd.f32 %v1427, %v1428
    %v1430 = vrot.slane %v1429, 4
    %v1431 = vadd.f32 %v1429, %v1430
    %v1432 = vrot.slane %v1431, 2
    %v1433 = vadd.f32 %v1431, %v1432
    %v1434 = vrot.slane %v1433, 1
    %v1435 = vadd.f32 %v1433, %v1434
    %v1436 = vsel %vm136, %v1371, 0.0
    %v1437 = vsel %vm136, %v1372, 0.0
    %v1438 = vadd.f32 %v1436, %v1437
    %v1439 = vrot.slane %v1438, 4
    %v1440 = vadd.f32 %v1438, %v1439
    %v1441 = vrot.slane %v1440, 2
    %v1442 = vadd.f32 %v1440, %v1441
    %v1443 = vrot.slane %v1442, 1
    %v1444 = vadd.f32 %v1442, %v1443
    %v1445 = vsel %vm136, %v1381, -inf
    %v1446 = vsel %vm136, %v1390, -inf
    %v1447 = vsel %vm136, %v1399, -inf
    %v1448 = vsel %vm136, %v1408, -inf
    %v1449 = vsel %vm136, %v1417, -inf
    %v1450 = vmax.f32 %v1445, %v1449
    %v1451 = vsel %vm136, %v1426, -inf
    %v1452 = vmax.f32 %v1446, %v1451
    %v1453 = vsel %vm136, %v1435, -inf
    %v1454 = vmax.f32 %v1447, %v1453
    %v1455 = vsel %vm136, %v1444, -inf
    %v1456 = vmax.f32 %v1448, %v1455
    %v1457 = vmax.f32 %v1450, %v1452
    %v1458 = vmax.f32 %v1454, %v1456
    %v1459 = vmax.f32 %v1457, %v1458
    %v1460 = vsub.f32 %v1381, %v1459
    %v1461 = vsub.f32 %v1390, %v1459
    %v1462 = vsub.f32 %v1399, %v1459
    %v1463 = vsub.f32 %v1408, %v1459
    %v1464 = vsub.f32 %v1417, %v1459
    %v1465 = vsub.f32 %v1426, %v1459
    %v1466 = vsub.f32 %v1435, %v1459
    %v1467 = vsub.f32 %v1444, %v1459
    %v1468 = vmul.f32 %v1460, 1.442695
    %v1469 = vpow.pop %v1468
    %v1470 = vmul.f32 %v1461, 1.442695
    %v1471 = vpow.pop %v1470
    %v1472 = vmul.f32 %v1462, 1.442695
    %v1473 = vpow.pop %v1472
    %v1474 = vmul.f32 %v1463, 1.442695
    %v1475 = vpow.pop %v1474
    %v1476 = vmul.f32 %v1464, 1.442695
    %v1477 = vpow.pop %v1476
    %v1478 = vmul.f32 %v1465, 1.442695
    %v1479 = vpow.pop %v1478
    %v1480 = vmul.f32 %v1466, 1.442695
    %v1481 = vpow.pop %v1480
    %v1482 = vmul.f32 %v1467, 1.442695
    %v1483 = vpow.pop %v1482
    %v1492 = vrot.slane %v1471, 7
    %v1493 = vsel %vm257, %v1492, %v1469
    %v1494 = vrot.slane %v1473, 6
    %v1495 = vsel %vm260, %v1494, %v1493
    %v1496 = vrot.slane %v1475, 5
    %v1497 = vsel %vm263, %v1496, %v1495
    %v1498 = vrot.slane %v1477, 4
    %v1499 = vsel %vm266, %v1498, %v1497
    %v1500 = vrot.slane %v1479, 3
    %v1501 = vsel %vm269, %v1500, %v1499
    %v1502 = vrot.slane %v1481, 2
    %v1503 = vsel %vm272, %v1502, %v1501
    %v1504 = vrot.slane %v1483, 1
    %v1505 = vsel %vm275, %v1504, %v1503
    %v1507 = vsel %vm136, %v1505, 0.0
    %v1508 = vrot.slane %v1507, 4
    %v1509 = vadd.f32 %v1507, %v1508
    %v1510 = vrot.slane %v1509, 2
    %v1511 = vadd.f32 %v1509, %v1510
    %v1512 = vrot.slane %v1511, 1
    %v1513 = vadd.f32 %v1511, %v1512
    %v1514 = vlaneseq
    %v1515 = vshrl.u32 %v1514, 7
    %v1516 = vsub.s32 0, %v1515
    %v1517 = vrot.slane %v1469, %v1516
    %v1518 = vlaneseq
    %v1519 = vshrl.u32 %v1518, 7
    %v1520 = vsub.s32 0, %v1519
    %v1521 = vrot.slane %v1471, %v1520
    %v1522 = vlaneseq
    %v1523 = vshrl.u32 %v1522, 7
    %v1524 = vsub.s32 0, %v1523
    %v1525 = vrot.slane %v1473, %v1524
    %v1526 = vlaneseq
    %v1527 = vshrl.u32 %v1526, 7
    %v1528 = vsub.s32 0, %v1527
    %v1529 = vrot.slane %v1475, %v1528
    %v1530 = vlaneseq
    %v1531 = vshrl.u32 %v1530, 7
    %v1532 = vsub.s32 0, %v1531
    %v1533 = vrot.slane %v1477, %v1532
    %v1534 = vlaneseq
    %v1535 = vshrl.u32 %v1534, 7
    %v1536 = vsub.s32 0, %v1535
    %v1537 = vrot.slane %v1479, %v1536
    %v1538 = vlaneseq
    %v1539 = vshrl.u32 %v1538, 7
    %v1540 = vsub.s32 0, %v1539
    %v1541 = vrot.slane %v1481, %v1540
    %v1542 = vlaneseq
    %v1543 = vshrl.u32 %v1542, 7
    %v1544 = vsub.s32 0, %v1543
    %v1545 = vrot.slane %v1483, %v1544
    %v1546 = vmul.f32 %v1517, %v104
    %v1547 = vmul.f32 %v1517, %v105
    %v1548 = vmul.f32 %v1521, %v106
    %v1549 = vmul.f32 %v1521, %v107
    %v1550 = vmul.f32 %v1525, %v108
    %v1551 = vmul.f32 %v1525, %v109
    %v1552 = vmul.f32 %v1529, %v110
    %v1553 = vmul.f32 %v1529, %v111
    %v1554 = vmul.f32 %v1533, %v112
    %v1555 = vmul.f32 %v1533, %v113
    %v1556 = vmul.f32 %v1537, %v114
    %v1557 = vmul.f32 %v1537, %v115
    %v1558 = vmul.f32 %v1541, %v116
    %v1559 = vmul.f32 %v1541, %v117
    %v1560 = vmul.f32 %v1545, %v118
    %v1561 = vmul.f32 %v1545, %v119
    %v1562 = vsel %vm136, %v1546, 0.0
    %v1563 = vsel %vm136, %v1548, 0.0
    %v1564 = vadd.f32 %v1562, %v1563
    %v1565 = vsel %vm136, %v1550, 0.0
    %v1566 = vadd.f32 %v1564, %v1565
    %v1567 = vsel %vm136, %v1552, 0.0
    %v1568 = vadd.f32 %v1566, %v1567
    %v1569 = vsel %vm136, %v1554, 0.0
    %v1570 = vadd.f32 %v1568, %v1569
    %v1571 = vsel %vm136, %v1556, 0.0
    %v1572 = vadd.f32 %v1570, %v1571
    %v1573 = vsel %vm136, %v1558, 0.0
    %v1574 = vadd.f32 %v1572, %v1573
    %v1575 = vsel %vm136, %v1560, 0.0
    %v1576 = vadd.f32 %v1574, %v1575
    %v1577 = vsel %vm136, %v1547, 0.0
    %v1578 = vsel %vm136, %v1549, 0.0
    %v1579 = vadd.f32 %v1577, %v1578
    %v1580 = vsel %vm136, %v1551, 0.0
    %v1581 = vadd.f32 %v1579, %v1580
    %v1582 = vsel %vm136, %v1553, 0.0
    %v1583 = vadd.f32 %v1581, %v1582
    %v1584 = vsel %vm136, %v1555, 0.0
    %v1585 = vadd.f32 %v1583, %v1584
    %v1586 = vsel %vm136, %v1557, 0.0
    %v1587 = vadd.f32 %v1585, %v1586
    %v1588 = vsel %vm136, %v1559, 0.0
    %v1589 = vadd.f32 %v1587, %v1588
    %v1590 = vsel %vm136, %v1561, 0.0
    %v1591 = vadd.f32 %v1589, %v1590
    %v1592 = vrcp.pop %v1513
    %v1593 = vmul.f32 1.0, %v1592
    %v1594 = vlaneseq
    %v1595 = vshrl.u32 %v1594, 7
    %v1596 = vsub.s32 0, %v1595
    %v1597 = vrot.slane %v1593, %v1596
    %v1598 = vmul.f32 %v1576, %v1597
    %v1599 = vmul.f32 %v1591, %v1597
    %s1600 = scalar_lea.vmem [#allocation8], 80
    %1601 = vst.msk [vmem:[%s1600] sm:$0xff] %vm136, %v1598
    %1602 = vst.msk [vmem:[%s1600 + $0x8] sm:$0xff] %vm136, %v1599
    %v1603 = vmul.f32 %v84, %v88
    %v1604 = vmul.f32 %v85, %v89
    %v1605 = vmul.f32 %v84, %v90
    %v1606 = vmul.f32 %v85, %v91
    %v1607 = vmul.f32 %v84, %v92
    %v1608 = vmul.f32 %v85, %v93
    %v1609 = vmul.f32 %v84, %v94
    %v1610 = vmul.f32 %v85, %v95
    %v1611 = vmul.f32 %v84, %v96
    %v1612 = vmul.f32 %v85, %v97
    %v1613 = vmul.f32 %v84, %v98
    %v1614 = vmul.f32 %v85, %v99
    %v1615 = vmul.f32 %v84, %v100
    %v1616 = vmul.f32 %v85, %v101
    %v1617 = vmul.f32 %v84, %v102
    %v1618 = vmul.f32 %v85, %v103
    %v1619 = vsel %vm136, %v1603, 0.0
    %v1620 = vsel %vm136, %v1604, 0.0
    %v1621 = vadd.f32 %v1619, %v1620
    %v1622 = vrot.slane %v1621, 4
    %v1623 = vadd.f32 %v1621, %v1622
    %v1624 = vrot.slane %v1623, 2
    %v1625 = vadd.f32 %v1623, %v1624
    %v1626 = vrot.slane %v1625, 1
    %v1627 = vadd.f32 %v1625, %v1626
    %v1628 = vsel %vm136, %v1605, 0.0
    %v1629 = vsel %vm136, %v1606, 0.0
    %v1630 = vadd.f32 %v1628, %v1629
    %v1631 = vrot.slane %v1630, 4
    %v1632 = vadd.f32 %v1630, %v1631
    %v1633 = vrot.slane %v1632, 2
    %v1634 = vadd.f32 %v1632, %v1633
    %v1635 = vrot.slane %v1634, 1
    %v1636 = vadd.f32 %v1634, %v1635
    %v1637 = vsel %vm136, %v1607, 0.0
    %v1638 = vsel %vm136, %v1608, 0.0
    %v1639 = vadd.f32 %v1637, %v1638
    %v1640 = vrot.slane %v1639, 4
    %v1641 = vadd.f32 %v1639, %v1640
    %v1642 = vrot.slane %v1641, 2
    %v1643 = vadd.f32 %v1641, %v1642
    %v1644 = vrot.slane %v1643, 1
    %v1645 = vadd.f32 %v1643, %v1644
    %v1646 = vsel %vm136, %v1609, 0.0
    %v1647 = vsel %vm136, %v1610, 0.0
    %v1648 = vadd.f32 %v1646, %v1647
    %v1649 = vrot.slane %v1648, 4
    %v1650 = vadd.f32 %v1648, %v1649
    %v1651 = vrot.slane %v1650, 2
    %v1652 = vadd.f32 %v1650, %v1651
    %v1653 = vrot.slane %v1652, 1
    %v1654 = vadd.f32 %v1652, %v1653
    %v1655 = vsel %vm136, %v1611, 0.0
    %v1656 = vsel %vm136, %v1612, 0.0
    %v1657 = vadd.f32 %v1655, %v1656
    %v1658 = vrot.slane %v1657, 4
    %v1659 = vadd.f32 %v1657, %v1658
    %v1660 = vrot.slane %v1659, 2
    %v1661 = vadd.f32 %v1659, %v1660
    %v1662 = vrot.slane %v1661, 1
    %v1663 = vadd.f32 %v1661, %v1662
    %v1664 = vsel %vm136, %v1613, 0.0
    %v1665 = vsel %vm136, %v1614, 0.0
    %v1666 = vadd.f32 %v1664, %v1665
    %v1667 = vrot.slane %v1666, 4
    %v1668 = vadd.f32 %v1666, %v1667
    %v1669 = vrot.slane %v1668, 2
    %v1670 = vadd.f32 %v1668, %v1669
    %v1671 = vrot.slane %v1670, 1
    %v1672 = vadd.f32 %v1670, %v1671
    %v1673 = vsel %vm136, %v1615, 0.0
    %v1674 = vsel %vm136, %v1616, 0.0
    %v1675 = vadd.f32 %v1673, %v1674
    %v1676 = vrot.slane %v1675, 4
    %v1677 = vadd.f32 %v1675, %v1676
    %v1678 = vrot.slane %v1677, 2
    %v1679 = vadd.f32 %v1677, %v1678
    %v1680 = vrot.slane %v1679, 1
    %v1681 = vadd.f32 %v1679, %v1680
    %v1682 = vsel %vm136, %v1617, 0.0
    %v1683 = vsel %vm136, %v1618, 0.0
    %v1684 = vadd.f32 %v1682, %v1683
    %v1685 = vrot.slane %v1684, 4
    %v1686 = vadd.f32 %v1684, %v1685
    %v1687 = vrot.slane %v1686, 2
    %v1688 = vadd.f32 %v1686, %v1687
    %v1689 = vrot.slane %v1688, 1
    %v1690 = vadd.f32 %v1688, %v1689
    %v1691 = vsel %vm136, %v1627, -inf
    %v1692 = vsel %vm136, %v1636, -inf
    %v1693 = vsel %vm136, %v1645, -inf
    %v1694 = vsel %vm136, %v1654, -inf
    %v1695 = vsel %vm136, %v1663, -inf
    %v1696 = vmax.f32 %v1691, %v1695
    %v1697 = vsel %vm136, %v1672, -inf
    %v1698 = vmax.f32 %v1692, %v1697
    %v1699 = vsel %vm136, %v1681, -inf
    %v1700 = vmax.f32 %v1693, %v1699
    %v1701 = vsel %vm136, %v1690, -inf
    %v1702 = vmax.f32 %v1694, %v1701
    %v1703 = vmax.f32 %v1696, %v1698
    %v1704 = vmax.f32 %v1700, %v1702
    %v1705 = vmax.f32 %v1703, %v1704
    %v1706 = vsub.f32 %v1627, %v1705
    %v1707 = vsub.f32 %v1636, %v1705
    %v1708 = vsub.f32 %v1645, %v1705
    %v1709 = vsub.f32 %v1654, %v1705
    %v1710 = vsub.f32 %v1663, %v1705
    %v1711 = vsub.f32 %v1672, %v1705
    %v1712 = vsub.f32 %v1681, %v1705
    %v1713 = vsub.f32 %v1690, %v1705
    %v1714 = vmul.f32 %v1706, 1.442695
    %v1715 = vpow.pop %v1714
    %v1716 = vmul.f32 %v1707, 1.442695
    %v1717 = vpow.pop %v1716
    %v1718 = vmul.f32 %v1708, 1.442695
    %v1719 = vpow.pop %v1718
    %v1720 = vmul.f32 %v1709, 1.442695
    %v1721 = vpow.pop %v1720
    %v1722 = vmul.f32 %v1710, 1.442695
    %v1723 = vpow.pop %v1722
    %v1724 = vmul.f32 %v1711, 1.442695
    %v1725 = vpow.pop %v1724
    %v1726 = vmul.f32 %v1712, 1.442695
    %v1727 = vpow.pop %v1726
    %v1728 = vmul.f32 %v1713, 1.442695
    %v1729 = vpow.pop %v1728
    %v1738 = vrot.slane %v1717, 7
    %v1739 = vsel %vm257, %v1738, %v1715
    %v1740 = vrot.slane %v1719, 6
    %v1741 = vsel %vm260, %v1740, %v1739
    %v1742 = vrot.slane %v1721, 5
    %v1743 = vsel %vm263, %v1742, %v1741
    %v1744 = vrot.slane %v1723, 4
    %v1745 = vsel %vm266, %v1744, %v1743
    %v1746 = vrot.slane %v1725, 3
    %v1747 = vsel %vm269, %v1746, %v1745
    %v1748 = vrot.slane %v1727, 2
    %v1749 = vsel %vm272, %v1748, %v1747
    %v1750 = vrot.slane %v1729, 1
    %v1751 = vsel %vm275, %v1750, %v1749
    %v1753 = vsel %vm136, %v1751, 0.0
    %v1754 = vrot.slane %v1753, 4
    %v1755 = vadd.f32 %v1753, %v1754
    %v1756 = vrot.slane %v1755, 2
    %v1757 = vadd.f32 %v1755, %v1756
    %v1758 = vrot.slane %v1757, 1
    %v1759 = vadd.f32 %v1757, %v1758
    %v1760 = vlaneseq
    %v1761 = vshrl.u32 %v1760, 7
    %v1762 = vsub.s32 0, %v1761
    %v1763 = vrot.slane %v1715, %v1762
    %v1764 = vlaneseq
    %v1765 = vshrl.u32 %v1764, 7
    %v1766 = vsub.s32 0, %v1765
    %v1767 = vrot.slane %v1717, %v1766
    %v1768 = vlaneseq
    %v1769 = vshrl.u32 %v1768, 7
    %v1770 = vsub.s32 0, %v1769
    %v1771 = vrot.slane %v1719, %v1770
    %v1772 = vlaneseq
    %v1773 = vshrl.u32 %v1772, 7
    %v1774 = vsub.s32 0, %v1773
    %v1775 = vrot.slane %v1721, %v1774
    %v1776 = vlaneseq
    %v1777 = vshrl.u32 %v1776, 7
    %v1778 = vsub.s32 0, %v1777
    %v1779 = vrot.slane %v1723, %v1778
    %v1780 = vlaneseq
    %v1781 = vshrl.u32 %v1780, 7
    %v1782 = vsub.s32 0, %v1781
    %v1783 = vrot.slane %v1725, %v1782
    %v1784 = vlaneseq
    %v1785 = vshrl.u32 %v1784, 7
    %v1786 = vsub.s32 0, %v1785
    %v1787 = vrot.slane %v1727, %v1786
    %v1788 = vlaneseq
    %v1789 = vshrl.u32 %v1788, 7
    %v1790 = vsub.s32 0, %v1789
    %v1791 = vrot.slane %v1729, %v1790
    %v1792 = vmul.f32 %v1763, %v104
    %v1793 = vmul.f32 %v1763, %v105
    %v1794 = vmul.f32 %v1767, %v106
    %v1795 = vmul.f32 %v1767, %v107
    %v1796 = vmul.f32 %v1771, %v108
    %v1797 = vmul.f32 %v1771, %v109
    %v1798 = vmul.f32 %v1775, %v110
    %v1799 = vmul.f32 %v1775, %v111
    %v1800 = vmul.f32 %v1779, %v112
    %v1801 = vmul.f32 %v1779, %v113
    %v1802 = vmul.f32 %v1783, %v114
    %v1803 = vmul.f32 %v1783, %v115
    %v1804 = vmul.f32 %v1787, %v116
    %v1805 = vmul.f32 %v1787, %v117
    %v1806 = vmul.f32 %v1791, %v118
    %v1807 = vmul.f32 %v1791, %v119
    %v1808 = vsel %vm136, %v1792, 0.0
    %v1809 = vsel %vm136, %v1794, 0.0
    %v1810 = vadd.f32 %v1808, %v1809
    %v1811 = vsel %vm136, %v1796, 0.0
    %v1812 = vadd.f32 %v1810, %v1811
    %v1813 = vsel %vm136, %v1798, 0.0
    %v1814 = vadd.f32 %v1812, %v1813
    %v1815 = vsel %vm136, %v1800, 0.0
    %v1816 = vadd.f32 %v1814, %v1815
    %v1817 = vsel %vm136, %v1802, 0.0
    %v1818 = vadd.f32 %v1816, %v1817
    %v1819 = vsel %vm136, %v1804, 0.0
    %v1820 = vadd.f32 %v1818, %v1819
    %v1821 = vsel %vm136, %v1806, 0.0
    %v1822 = vadd.f32 %v1820, %v1821
    %v1823 = vsel %vm136, %v1793, 0.0
    %v1824 = vsel %vm136, %v1795, 0.0
    %v1825 = vadd.f32 %v1823, %v1824
    %v1826 = vsel %vm136, %v1797, 0.0
    %v1827 = vadd.f32 %v1825, %v1826
    %v1828 = vsel %vm136, %v1799, 0.0
    %v1829 = vadd.f32 %v1827, %v1828
    %v1830 = vsel %vm136, %v1801, 0.0
    %v1831 = vadd.f32 %v1829, %v1830
    %v1832 = vsel %vm136, %v1803, 0.0
    %v1833 = vadd.f32 %v1831, %v1832
    %v1834 = vsel %vm136, %v1805, 0.0
    %v1835 = vadd.f32 %v1833, %v1834
    %v1836 = vsel %vm136, %v1807, 0.0
    %v1837 = vadd.f32 %v1835, %v1836
    %v1838 = vrcp.pop %v1759
    %v1839 = vmul.f32 1.0, %v1838
    %v1840 = vlaneseq
    %v1841 = vshrl.u32 %v1840, 7
    %v1842 = vsub.s32 0, %v1841
    %v1843 = vrot.slane %v1839, %v1842
    %v1844 = vmul.f32 %v1822, %v1843
    %v1845 = vmul.f32 %v1837, %v1843
    %s1846 = scalar_lea.vmem [#allocation8], 96
    %1847 = vst.msk [vmem:[%s1846] sm:$0xff] %vm136, %v1844
    %1848 = vst.msk [vmem:[%s1846 + $0x8] sm:$0xff] %vm136, %v1845
    %v1849 = vmul.f32 %v86, %v88
    %v1850 = vmul.f32 %v87, %v89
    %v1851 = vmul.f32 %v86, %v90
    %v1852 = vmul.f32 %v87, %v91
    %v1853 = vmul.f32 %v86, %v92
    %v1854 = vmul.f32 %v87, %v93
    %v1855 = vmul.f32 %v86, %v94
    %v1856 = vmul.f32 %v87, %v95
    %v1857 = vmul.f32 %v86, %v96
    %v1858 = vmul.f32 %v87, %v97
    %v1859 = vmul.f32 %v86, %v98
    %v1860 = vmul.f32 %v87, %v99
    %v1861 = vmul.f32 %v86, %v100
    %v1862 = vmul.f32 %v87, %v101
    %v1863 = vmul.f32 %v86, %v102
    %v1864 = vmul.f32 %v87, %v103
    %v1865 = vsel %vm136, %v1849, 0.0
    %v1866 = vsel %vm136, %v1850, 0.0
    %v1867 = vadd.f32 %v1865, %v1866
    %v1868 = vrot.slane %v1867, 4
    %v1869 = vadd.f32 %v1867, %v1868
    %v1870 = vrot.slane %v1869, 2
    %v1871 = vadd.f32 %v1869, %v1870
    %v1872 = vrot.slane %v1871, 1
    %v1873 = vadd.f32 %v1871, %v1872
    %v1874 = vsel %vm136, %v1851, 0.0
    %v1875 = vsel %vm136, %v1852, 0.0
    %v1876 = vadd.f32 %v1874, %v1875
    %v1877 = vrot.slane %v1876, 4
    %v1878 = vadd.f32 %v1876, %v1877
    %v1879 = vrot.slane %v1878, 2
    %v1880 = vadd.f32 %v1878, %v1879
    %v1881 = vrot.slane %v1880, 1
    %v1882 = vadd.f32 %v1880, %v1881
    %v1883 = vsel %vm136, %v1853, 0.0
    %v1884 = vsel %vm136, %v1854, 0.0
    %v1885 = vadd.f32 %v1883, %v1884
    %v1886 = vrot.slane %v1885, 4
    %v1887 = vadd.f32 %v1885, %v1886
    %v1888 = vrot.slane %v1887, 2
    %v1889 = vadd.f32 %v1887, %v1888
    %v1890 = vrot.slane %v1889, 1
    %v1891 = vadd.f32 %v1889, %v1890
    %v1892 = vsel %vm136, %v1855, 0.0
    %v1893 = vsel %vm136, %v1856, 0.0
    %v1894 = vadd.f32 %v1892, %v1893
    %v1895 = vrot.slane %v1894, 4
    %v1896 = vadd.f32 %v1894, %v1895
    %v1897 = vrot.slane %v1896, 2
    %v1898 = vadd.f32 %v1896, %v1897
    %v1899 = vrot.slane %v1898, 1
    %v1900 = vadd.f32 %v1898, %v1899
    %v1901 = vsel %vm136, %v1857, 0.0
    %v1902 = vsel %vm136, %v1858, 0.0
    %v1903 = vadd.f32 %v1901, %v1902
    %v1904 = vrot.slane %v1903, 4
    %v1905 = vadd.f32 %v1903, %v1904
    %v1906 = vrot.slane %v1905, 2
    %v1907 = vadd.f32 %v1905, %v1906
    %v1908 = vrot.slane %v1907, 1
    %v1909 = vadd.f32 %v1907, %v1908
    %v1910 = vsel %vm136, %v1859, 0.0
    %v1911 = vsel %vm136, %v1860, 0.0
    %v1912 = vadd.f32 %v1910, %v1911
    %v1913 = vrot.slane %v1912, 4
    %v1914 = vadd.f32 %v1912, %v1913
    %v1915 = vrot.slane %v1914, 2
    %v1916 = vadd.f32 %v1914, %v1915
    %v1917 = vrot.slane %v1916, 1
    %v1918 = vadd.f32 %v1916, %v1917
    %v1919 = vsel %vm136, %v1861, 0.0
    %v1920 = vsel %vm136, %v1862, 0.0
    %v1921 = vadd.f32 %v1919, %v1920
    %v1922 = vrot.slane %v1921, 4
    %v1923 = vadd.f32 %v1921, %v1922
    %v1924 = vrot.slane %v1923, 2
    %v1925 = vadd.f32 %v1923, %v1924
    %v1926 = vrot.slane %v1925, 1
    %v1927 = vadd.f32 %v1925, %v1926
    %v1928 = vsel %vm136, %v1863, 0.0
    %v1929 = vsel %vm136, %v1864, 0.0
    %v1930 = vadd.f32 %v1928, %v1929
    %v1931 = vrot.slane %v1930, 4
    %v1932 = vadd.f32 %v1930, %v1931
    %v1933 = vrot.slane %v1932, 2
    %v1934 = vadd.f32 %v1932, %v1933
    %v1935 = vrot.slane %v1934, 1
    %v1936 = vadd.f32 %v1934, %v1935
    %v1937 = vsel %vm136, %v1873, -inf
    %v1938 = vsel %vm136, %v1882, -inf
    %v1939 = vsel %vm136, %v1891, -inf
    %v1940 = vsel %vm136, %v1900, -inf
    %v1941 = vsel %vm136, %v1909, -inf
    %v1942 = vmax.f32 %v1937, %v1941
    %v1943 = vsel %vm136, %v1918, -inf
    %v1944 = vmax.f32 %v1938, %v1943
    %v1945 = vsel %vm136, %v1927, -inf
    %v1946 = vmax.f32 %v1939, %v1945
    %v1947 = vsel %vm136, %v1936, -inf
    %v1948 = vmax.f32 %v1940, %v1947
    %v1949 = vmax.f32 %v1942, %v1944
    %v1950 = vmax.f32 %v1946, %v1948
    %v1951 = vmax.f32 %v1949, %v1950
    %v1952 = vsub.f32 %v1873, %v1951
    %v1953 = vsub.f32 %v1882, %v1951
    %v1954 = vsub.f32 %v1891, %v1951
    %v1955 = vsub.f32 %v1900, %v1951
    %v1956 = vsub.f32 %v1909, %v1951
    %v1957 = vsub.f32 %v1918, %v1951
    %v1958 = vsub.f32 %v1927, %v1951
    %v1959 = vsub.f32 %v1936, %v1951
    %v1960 = vmul.f32 %v1952, 1.442695
    %v1961 = vpow.pop %v1960
    %v1962 = vmul.f32 %v1953, 1.442695
    %v1963 = vpow.pop %v1962
    %v1964 = vmul.f32 %v1954, 1.442695
    %v1965 = vpow.pop %v1964
    %v1966 = vmul.f32 %v1955, 1.442695
    %v1967 = vpow.pop %v1966
    %v1968 = vmul.f32 %v1956, 1.442695
    %v1969 = vpow.pop %v1968
    %v1970 = vmul.f32 %v1957, 1.442695
    %v1971 = vpow.pop %v1970
    %v1972 = vmul.f32 %v1958, 1.442695
    %v1973 = vpow.pop %v1972
    %v1974 = vmul.f32 %v1959, 1.442695
    %v1975 = vpow.pop %v1974
    %v1984 = vrot.slane %v1963, 7
    %v1985 = vsel %vm257, %v1984, %v1961
    %v1986 = vrot.slane %v1965, 6
    %v1987 = vsel %vm260, %v1986, %v1985
    %v1988 = vrot.slane %v1967, 5
    %v1989 = vsel %vm263, %v1988, %v1987
    %v1990 = vrot.slane %v1969, 4
    %v1991 = vsel %vm266, %v1990, %v1989
    %v1992 = vrot.slane %v1971, 3
    %v1993 = vsel %vm269, %v1992, %v1991
    %v1994 = vrot.slane %v1973, 2
    %v1995 = vsel %vm272, %v1994, %v1993
    %v1996 = vrot.slane %v1975, 1
    %v1997 = vsel %vm275, %v1996, %v1995
    %v1999 = vsel %vm136, %v1997, 0.0
    %v2000 = vrot.slane %v1999, 4
    %v2001 = vadd.f32 %v1999, %v2000
    %v2002 = vrot.slane %v2001, 2
    %v2003 = vadd.f32 %v2001, %v2002
    %v2004 = vrot.slane %v2003, 1
    %v2005 = vadd.f32 %v2003, %v2004
    %v2006 = vlaneseq
    %v2007 = vshrl.u32 %v2006, 7
    %v2008 = vsub.s32 0, %v2007
    %v2009 = vrot.slane %v1961, %v2008
    %v2010 = vlaneseq
    %v2011 = vshrl.u32 %v2010, 7
    %v2012 = vsub.s32 0, %v2011
    %v2013 = vrot.slane %v1963, %v2012
    %v2014 = vlaneseq
    %v2015 = vshrl.u32 %v2014, 7
    %v2016 = vsub.s32 0, %v2015
    %v2017 = vrot.slane %v1965, %v2016
    %v2018 = vlaneseq
    %v2019 = vshrl.u32 %v2018, 7
    %v2020 = vsub.s32 0, %v2019
    %v2021 = vrot.slane %v1967, %v2020
    %v2022 = vlaneseq
    %v2023 = vshrl.u32 %v2022, 7
    %v2024 = vsub.s32 0, %v2023
    %v2025 = vrot.slane %v1969, %v2024
    %v2026 = vlaneseq
    %v2027 = vshrl.u32 %v2026, 7
    %v2028 = vsub.s32 0, %v2027
    %v2029 = vrot.slane %v1971, %v2028
    %v2030 = vlaneseq
    %v2031 = vshrl.u32 %v2030, 7
    %v2032 = vsub.s32 0, %v2031
    %v2033 = vrot.slane %v1973, %v2032
    %v2034 = vlaneseq
    %v2035 = vshrl.u32 %v2034, 7
    %v2036 = vsub.s32 0, %v2035
    %v2037 = vrot.slane %v1975, %v2036
    %v2038 = vmul.f32 %v2009, %v104
    %v2039 = vmul.f32 %v2009, %v105
    %v2040 = vmul.f32 %v2013, %v106
    %v2041 = vmul.f32 %v2013, %v107
    %v2042 = vmul.f32 %v2017, %v108
    %v2043 = vmul.f32 %v2017, %v109
    %v2044 = vmul.f32 %v2021, %v110
    %v2045 = vmul.f32 %v2021, %v111
    %v2046 = vmul.f32 %v2025, %v112
    %v2047 = vmul.f32 %v2025, %v113
    %v2048 = vmul.f32 %v2029, %v114
    %v2049 = vmul.f32 %v2029, %v115
    %v2050 = vmul.f32 %v2033, %v116
    %v2051 = vmul.f32 %v2033, %v117
    %v2052 = vmul.f32 %v2037, %v118
    %v2053 = vmul.f32 %v2037, %v119
    %v2054 = vsel %vm136, %v2038, 0.0
    %v2055 = vsel %vm136, %v2040, 0.0
    %v2056 = vadd.f32 %v2054, %v2055
    %v2057 = vsel %vm136, %v2042, 0.0
    %v2058 = vadd.f32 %v2056, %v2057
    %v2059 = vsel %vm136, %v2044, 0.0
    %v2060 = vadd.f32 %v2058, %v2059
    %v2061 = vsel %vm136, %v2046, 0.0
    %v2062 = vadd.f32 %v2060, %v2061
    %v2063 = vsel %vm136, %v2048, 0.0
    %v2064 = vadd.f32 %v2062, %v2063
    %v2065 = vsel %vm136, %v2050, 0.0
    %v2066 = vadd.f32 %v2064, %v2065
    %v2067 = vsel %vm136, %v2052, 0.0
    %v2068 = vadd.f32 %v2066, %v2067
    %v2069 = vsel %vm136, %v2039, 0.0
    %v2070 = vsel %vm136, %v2041, 0.0
    %v2071 = vadd.f32 %v2069, %v2070
    %v2072 = vsel %vm136, %v2043, 0.0
    %v2073 = vadd.f32 %v2071, %v2072
    %v2074 = vsel %vm136, %v2045, 0.0
    %v2075 = vadd.f32 %v2073, %v2074
    %v2076 = vsel %vm136, %v2047, 0.0
    %v2077 = vadd.f32 %v2075, %v2076
    %v2078 = vsel %vm136, %v2049, 0.0
    %v2079 = vadd.f32 %v2077, %v2078
    %v2080 = vsel %vm136, %v2051, 0.0
    %v2081 = vadd.f32 %v2079, %v2080
    %v2082 = vsel %vm136, %v2053, 0.0
    %v2083 = vadd.f32 %v2081, %v2082
    %v2084 = vrcp.pop %v2005
    %v2085 = vmul.f32 1.0, %v2084
    %v2086 = vlaneseq
    %v2087 = vshrl.u32 %v2086, 7
    %v2088 = vsub.s32 0, %v2087
    %v2089 = vrot.slane %v2085, %v2088
    %v2090 = vmul.f32 %v2068, %v2089
    %v2091 = vmul.f32 %v2083, %v2089
    %s2092 = scalar_lea.vmem [#allocation8], 112
    %2093 = vst.msk [vmem:[%s2092] sm:$0xff] %vm136, %v2090
    %2094 = vst.msk [vmem:[%s2092 + $0x8] sm:$0xff] %vm136, %v2091
    // Predicated region
    $region26: #{tpu_custom_call.1} parent=1 // pred_check
      _
    $region27: #{tpu_custom_call.1} parent=1 // pred_check_branch
      %2096 = sbr.rel (0) target = $region29
    $region28: #{tpu_custom_call.1} parent=1 // pred_region
      %s2098 = ssub.s32 2048, 2048
      %2099 = vsyncadd [#allocation4], %s2098
      %s2100 = sshll.u32 [#allocation8], 4
      %s2101 = int_to_ptr.vmem [resolvable:$true] %s2100
      %2106 = dma.vmem_to_hbm [thread:$0]  %s2101, 2048, %s3, [#allocation4], 128, 128, 8
    $region29: #{tpu_custom_call.1} parent=1 // pred_fallthru
      _
    // Predicated region
    $region30: #{tpu_custom_call.1} parent=1 // pred_check
      _
    $region31: #{tpu_custom_call.1} parent=1 // pred_check_branch
      %2108 = sbr.rel (0) target = $region33
    $region32: #{tpu_custom_call.1} parent=1 // pred_region
      %2109 = dma.done [#allocation4], 2048
    $region33: #{tpu_custom_call.1} parent=1 // pred_fallthru
      _
    %2110 = vsyncpa [#allocation3], 1
    %2111 = vsyncpa [#allocation6], 1
    %2112 = vsyncpa [#allocation4], 1

</llo_original>
